<compile_context>
chip_gen: v6e
topology: v6e:2x2x1
jax: 0.10.0
libtpu: 0.0.40
codegen_flags: <defaults>
</compile_context>

<pallas_src>
import jax
import jax.numpy as jnp
from jax.experimental import pallas as pl
from jax.experimental.pallas import tpu as pltpu

EPS = 1e-5
VMEM_LIMIT = 32 * 1024 * 1024  # safe on v5e/v6e/v7x; tiles here are tiny


def bottleneck_forward(x_nchw, params):
    """x_nchw: (N, Cin, H, W) float32 -> (N, Cout, H, W) float32 (Cout == Cin)."""
    (w1, g1, b1, w2f, g2, b2, w3, g3, b3) = params
    N, Cin, H, W = x_nchw.shape
    width = w1.shape[1]
    Cout = w3.shape[1]
    assert Cin == Cout, "identity residual requires inplanes == planes * 4"
    HW = H * W
    inv_cnt = 1.0 / float(N * HW)

    # TODO(synk): keep the surrounding model in NHWC so this per-block
    # NCHW<->NHWC transpose glue (extra HBM passes) disappears.
    x = jnp.transpose(x_nchw, (0, 2, 3, 1))

    # ---- spec helpers -------------------------------------------------------
    def img_spec(c):  # one image (1, H, W, c) per grid step
        return pl.BlockSpec((1, H, W, c), lambda n: (n, 0, 0, 0))

    def rep_spec(shape):  # same small block (weights / BN params / stats) each step
        shape = tuple(int(s) for s in shape)
        return pl.BlockSpec(shape, lambda n: (0,) * len(shape))

    def bn_affine(stat, g, b):
        # one-pass batch stats: mean = s/cnt, var = ss/cnt - mean^2 (biased)
        mean = stat[0:1, :] * inv_cnt
        var = stat[1:2, :] * inv_cnt - mean * mean
        scale = g * jax.lax.rsqrt(var + EPS)
        shift = b - mean * scale
        return scale, shift

    cp_arb = pltpu.CompilerParams(dimension_semantics=("arbitrary",),
                                  vmem_limit_bytes=VMEM_LIMIT)
    cp_par = pltpu.CompilerParams(dimension_semantics=("parallel",),
                                  vmem_limit_bytes=VMEM_LIMIT)

    # ---- K1: conv1 (1x1 == matmul) + stats1 ---------------------------------
    def conv1_kernel(x_ref, w_ref, h_ref, s_ref):
        @pl.when(pl.program_id(0) == 0)
        def _():
            s_ref[...] = jnp.zeros_like(s_ref)

        xv = x_ref[...].reshape(HW, Cin).astype(jnp.bfloat16)
        h = jnp.dot(xv, w_ref[...], preferred_element_type=jnp.float32)
        h_ref[...] = h.reshape(1, H, W, width)
        s_ref[...] += jnp.concatenate(
            [jnp.sum(h, axis=0, keepdims=True),
             jnp.sum(h * h, axis=0, keepdims=True)], axis=0)

    h1, s1 = pl.pallas_call(
        conv1_kernel,
        grid=(N,),
        in_specs=[img_spec(Cin), rep_spec(w1.shape)],
        out_specs=(img_spec(width), rep_spec((2, width))),
        out_shape=(jax.ShapeDtypeStruct((N, H, W, width), jnp.float32),
                   jax.ShapeDtypeStruct((2, width), jnp.float32)),
        compiler_params=cp_arb,
    )(x, w1)

    # ---- K2: bn1+relu -> conv2 (3x3 as single im2col matmul) + stats2 -------
    def conv2_kernel(h1_ref, s1_ref, g_ref, b_ref, w_ref, h2_ref, s2_ref,
                     pad_ref):
        @pl.when(pl.program_id(0) == 0)
        def _():
            s2_ref[...] = jnp.zeros_like(s2_ref)
            # Zero the padded scratch only once: the interior is fully
            # overwritten every grid step, the 1-pixel border stays zero.
            pad_ref[...] = jnp.zeros_like(pad_ref)

        scale, shift = bn_affine(s1_ref[...], g_ref[...], b_ref[...])
        a = jnp.maximum(h1_ref[...].reshape(HW, width) * scale + shift, 0.0)
        pad_ref[:, 1:H + 1, 1:W + 1, :] = a.reshape(1, H, W, width)

        taps = [pad_ref[:, dy:dy + H, dx:dx + W, :].reshape(HW, width)
                for dy in range(3) for dx in range(3)]
        col = jnp.concatenate(taps, axis=-1).astype(jnp.bfloat16)  # (HW, 9*width)
        h2 = jnp.dot(col, w_ref[...], preferred_element_type=jnp.float32)
        h2_ref[...] = h2.reshape(1, H, W, width)
        s2_ref[...] += jnp.concatenate(
            [jnp.sum(h2, axis=0, keepdims=True),
             jnp.sum(h2 * h2, axis=0, keepdims=True)], axis=0)

    h2, s2 = pl.pallas_call(
        conv2_kernel,
        grid=(N,),
        in_specs=[img_spec(width), rep_spec((2, width)), rep_spec(g1.shape),
                  rep_spec(b1.shape), rep_spec(w2f.shape)],
        out_specs=(img_spec(width), rep_spec((2, width))),
        out_shape=(jax.ShapeDtypeStruct((N, H, W, width), jnp.float32),
                   jax.ShapeDtypeStruct((2, width), jnp.float32)),
        scratch_shapes=[pltpu.VMEM((1, H + 2, W + 2, width), jnp.float32)],
        compiler_params=cp_arb,
    )(h1, s1, g1, b1, w2f)

    # ---- K3: bn2+relu -> conv3 (1x1) + stats3 --------------------------------
    def conv3_kernel(h2_ref, s2_ref, g_ref, b_ref, w_ref, h3_ref, s3_ref):
        @pl.when(pl.program_id(0) == 0)
        def _():
            s3_ref[...] = jnp.zeros_like(s3_ref)

        scale, shift = bn_affine(s2_ref[...], g_ref[...], b_ref[...])
        a = jnp.maximum(h2_ref[...].reshape(HW, width) * scale + shift, 0.0)
        h3 = jnp.dot(a.astype(jnp.bfloat16), w_ref[...],
                     preferred_element_type=jnp.float32)
        h3_ref[...] = h3.reshape(1, H, W, Cout)
        s3_ref[...] += jnp.concatenate(
            [jnp.sum(h3, axis=0, keepdims=True),
             jnp.sum(h3 * h3, axis=0, keepdims=True)], axis=0)

    h3, s3 = pl.pallas_call(
        conv3_kernel,
        grid=(N,),
        in_specs=[img_spec(width), rep_spec((2, width)), rep_spec(g2.shape),
                  rep_spec(b2.shape), rep_spec(w3.shape)],
        out_specs=(img_spec(Cout), rep_spec((2, Cout))),
        out_shape=(jax.ShapeDtypeStruct((N, H, W, Cout), jnp.float32),
                   jax.ShapeDtypeStruct((2, Cout), jnp.float32)),
        compiler_params=cp_arb,
    )(h2, s2, g2, b2, w3)

    # ---- K4: bn3 -> identity residual add -> relu (fully parallel) ----------
    def bn3_res_kernel(h3_ref, s3_ref, g_ref, b_ref, xr_ref, o_ref):
        scale, shift = bn_affine(s3_ref[...], g_ref[...], b_ref[...])
        h = h3_ref[...].reshape(HW, Cout) * scale + shift
        o = jnp.maximum(h + xr_ref[...].reshape(HW, Cout), 0.0)
        o_ref[...] = o.reshape(1, H, W, Cout)

    out_nhwc = pl.pallas_call(
        bn3_res_kernel,
        grid=(N,),
        in_specs=[img_spec(Cout), rep_spec((2, Cout)), rep_spec(g3.shape),
                  rep_spec(b3.shape), img_spec(Cin)],
        out_specs=img_spec(Cout),
        out_shape=jax.ShapeDtypeStruct((N, H, W, Cout), jnp.float32),
        compiler_params=cp_par,
    )(h3, s3, g3, b3, x)

    return jnp.transpose(out_nhwc, (0, 3, 1, 2))


def init_params(key, inplanes, planes, base_width=64, groups=1):
    """Synthetic weights matching the torch module's shapes.

    Conv weights are stored pre-transposed for NHWC matmuls and pre-cast to
    bf16 (MXU-native):
      conv1: (inplanes, width)
      conv2: (9*width, width)   # im2col layout, (kh, kw, cin)-major rows
      conv3: (width, planes*4)
    BatchNorm affine params stay float32.
    """
    expansion = 4
    width = int(planes * (base_width / 64.0)) * groups
    cout = planes * expansion
    ks = jax.random.split(key, 9)

    def winit(k, shape, fan_in):
        return jax.random.normal(k, shape, jnp.float32) / jnp.sqrt(fan_in)

    w1 = winit(ks[0], (inplanes, width), inplanes)
    w2 = winit(ks[1], (3, 3, width, width), 9 * width)
    w3 = winit(ks[2], (width, cout), width)
    g1 = 1.0 + 0.1 * jax.random.normal(ks[3], (1, width), jnp.float32)
    b1 = 0.1 * jax.random.normal(ks[4], (1, width), jnp.float32)
    g2 = 1.0 + 0.1 * jax.random.normal(ks[5], (1, width), jnp.float32)
    b2 = 0.1 * jax.random.normal(ks[6], (1, width), jnp.float32)
    g3 = 1.0 + 0.1 * jax.random.normal(ks[7], (1, cout), jnp.float32)
    b3 = 0.1 * jax.random.normal(ks[8], (1, cout), jnp.float32)

    w1b = w1.astype(jnp.bfloat16)
    w2b = w2.reshape(9 * width, width).astype(jnp.bfloat16)
    w3b = w3.astype(jnp.bfloat16)
    return (w1b, g1, b1, w2b, g2, b2, w3b, g3, b3)


def bottleneck_reference(x_nchw, params):
    """Pure-JAX mirror of the kernel math (training-mode BN, bf16 matmuls)."""
    (w1, g1, b1, w2f, g2, b2, w3, g3, b3) = params
    N, Cin, H, W = x_nchw.shape
    width = w1.shape[1]
    cout = w3.shape[1]
    x = jnp.transpose(x_nchw, (0, 2, 3, 1))
    xf = x.reshape(N * H * W, Cin)

    def bn(h, g, b):
        mean = jnp.mean(h, axis=0, keepdims=True)
        var = jnp.mean(h * h, axis=0, keepdims=True) - mean * mean
        scale = g * jax.lax.rsqrt(var + EPS)
        shift = b - mean * scale
        return h * scale + shift

    h1 = jnp.dot(xf.astype(jnp.bfloat16), w1, preferred_element_type=jnp.float32)
    a1 = jnp.maximum(bn(h1, g1, b1), 0.0).reshape(N, H, W, width)
    pad = jnp.pad(a1, ((0, 0), (1, 1), (1, 1), (0, 0)))
    taps = [pad[:, dy:dy + H, dx:dx + W, :].reshape(N * H * W, width)
            for dy in range(3) for dx in range(3)]
    col = jnp.concatenate(taps, axis=-1).astype(jnp.bfloat16)
    h2 = jnp.dot(col, w2f, preferred_element_type=jnp.float32)
    a2 = jnp.maximum(bn(h2, g2, b2), 0.0)
    h3 = jnp.dot(a2.astype(jnp.bfloat16), w3, preferred_element_type=jnp.float32)
    h3 = bn(h3, g3, b3)
    out = jnp.maximum(h3 + xf, 0.0)
    return jnp.transpose(out.reshape(N, H, W, cout), (0, 3, 1, 2))


if __name__ == "__main__":
    # Small but lane-friendlier shapes consistent with Bottleneck:
    # identity residual (stride=1, downsample=None) => inplanes == planes * 4.
    N, planes, H, W = 2, 32, 8, 8
    inplanes = planes * 4  # 128 channels on the big tensors -> lane-dense I/O

    key = jax.random.PRNGKey(0)
    k_x, k_p = jax.random.split(key)
    x = jax.random.normal(k_x, (N, inplanes, H, W), jnp.float32)
    params = init_params(k_p, inplanes, planes)

    fwd = jax.jit(bottleneck_forward)
    out = fwd(x, params)
    jax.block_until_ready(out)

    ref = bottleneck_reference(x, params)
    assert out.shape == (N, planes * 4, H, W)
    assert bool(jnp.all(jnp.isfinite(out)))
    assert bool(jnp.all(out >= 0.0))  # final ReLU
    max_err = float(jnp.max(jnp.abs(out - ref)))
    assert max_err < 2e-3, f"mismatch vs reference: max abs err = {max_err}"
    print("KERNEL_OK")
</pallas_src>

<mosaic_0001>
module attributes {stable_mosaic.version = 11 : i64} {
  func.func @conv2_kernel(%arg0: i32, %arg1: memref<1x8x8x32xf32, #tpu.memory_space<vmem>>, %arg2: memref<2x32xf32, #tpu.memory_space<vmem>>, %arg3: memref<1x32xf32, #tpu.memory_space<vmem>>, %arg4: memref<1x32xf32, #tpu.memory_space<vmem>>, %arg5: memref<288x32xbf16, #tpu.memory_space<vmem>>, %arg6: memref<1x8x8x32xf32, #tpu.memory_space<vmem>>, %arg7: memref<2x32xf32, #tpu.memory_space<vmem>>, %arg8: memref<1x10x10x32xf32, #tpu.memory_space<vmem>>) attributes {dimension_semantics = [#tpu.dimension_semantics<arbitrary>], iteration_bounds = array<i64: 2>, scalar_prefetch = 0 : i64, scratch_operands = 1 : i64, tpu.core_type = #tpu.core_type<tc>, window_params = [{transform_indices = @transform_0, window_bounds = array<i64: 1, 8, 8, 32>}, {pipeline_mode = #tpu.pipeline_mode<synchronous>, transform_indices = @transform_1, window_bounds = array<i64: 2, 32>}, {pipeline_mode = #tpu.pipeline_mode<synchronous>, transform_indices = @transform_2, window_bounds = array<i64: 1, 32>}, {pipeline_mode = #tpu.pipeline_mode<synchronous>, transform_indices = @transform_3, window_bounds = array<i64: 1, 32>}, {pipeline_mode = #tpu.pipeline_mode<synchronous>, transform_indices = @transform_4, window_bounds = array<i64: 288, 32>}, {transform_indices = @transform_5, window_bounds = array<i64: 1, 8, 8, 32>}, {pipeline_mode = #tpu.pipeline_mode<synchronous>, transform_indices = @transform_6, window_bounds = array<i64: 2, 32>}]} {
    %c0_i32 = arith.constant 0 : i32
    %0 = arith.cmpi eq, %arg0, %c0_i32 : i32
    %1 = arith.extui %0 : i1 to i32
    %c0_i32_0 = arith.constant 0 : i32
    %2 = arith.cmpi ne, %1, %c0_i32_0 : i32
    scf.if %2 {
      %cst_64 = arith.constant 0.000000e+00 : f32
      %63 = vector.broadcast %cst_64 : f32 to vector<2x32xf32>
      %c0_65 = arith.constant 0 : index
      %c0_66 = arith.constant 0 : index
      %64 = vector.load %arg7[%c0_65, %c0_66] : memref<2x32xf32, #tpu.memory_space<vmem>>, vector<2x32xf32>
      tpu.vector_store %arg7[%c0_65, %c0_66], %63 {strides = array<i32>} : memref<2x32xf32, #tpu.memory_space<vmem>>, vector<2x32xf32>,
      %cst_67 = arith.constant 0.000000e+00 : f32
      %65 = vector.broadcast %cst_67 : f32 to vector<1x10x10x32xf32>
      %c0_68 = arith.constant 0 : index
      %c0_69 = arith.constant 0 : index
      %c0_70 = arith.constant 0 : index
      %c0_71 = arith.constant 0 : index
      %66 = vector.load %arg8[%c0_68, %c0_69, %c0_70, %c0_71] : memref<1x10x10x32xf32, #tpu.memory_space<vmem>>, vector<1x10x10x32xf32>
      tpu.vector_store %arg8[%c0_68, %c0_69, %c0_70, %c0_71], %65 {strides = array<i32>} : memref<1x10x10x32xf32, #tpu.memory_space<vmem>>, vector<1x10x10x32xf32>,
    } else {
    }
    %c0 = arith.constant 0 : index
    %c0_1 = arith.constant 0 : index
    %3 = vector.load %arg2[%c0, %c0_1] : memref<2x32xf32, #tpu.memory_space<vmem>>, vector<2x32xf32>
    %c0_2 = arith.constant 0 : index
    %c0_3 = arith.constant 0 : index
    %4 = vector.load %arg3[%c0_2, %c0_3] : memref<1x32xf32, #tpu.memory_space<vmem>>, vector<1x32xf32>
    %c0_4 = arith.constant 0 : index
    %c0_5 = arith.constant 0 : index
    %5 = vector.load %arg4[%c0_4, %c0_5] : memref<1x32xf32, #tpu.memory_space<vmem>>, vector<1x32xf32>
    %6 = vector.extract_strided_slice %3 {offsets = [0, 0], sizes = [1, 32], strides = [1, 1]} : vector<2x32xf32> to vector<1x32xf32>
    %cst = arith.constant 7.812500e-03 : f32
    %7 = vector.broadcast %cst : f32 to vector<1x32xf32>
    %8 = arith.mulf %6, %7 : vector<1x32xf32>
    %9 = vector.extract_strided_slice %3 {offsets = [1, 0], sizes = [1, 32], strides = [1, 1]} : vector<2x32xf32> to vector<1x32xf32>
    %cst_6 = arith.constant 7.812500e-03 : f32
    %10 = vector.broadcast %cst_6 : f32 to vector<1x32xf32>
    %11 = arith.mulf %9, %10 : vector<1x32xf32>
    %12 = arith.mulf %8, %8 : vector<1x32xf32>
    %13 = arith.subf %11, %12 : vector<1x32xf32>
    %cst_7 = arith.constant 9.99999974E-6 : f32
    %14 = vector.broadcast %cst_7 : f32 to vector<1x32xf32>
    %15 = arith.addf %13, %14 : vector<1x32xf32>
    %16 = math.rsqrt %15 : vector<1x32xf32>
    %17 = arith.mulf %4, %16 : vector<1x32xf32>
    %18 = arith.mulf %8, %17 : vector<1x32xf32>
    %19 = arith.subf %5, %18 : vector<1x32xf32>
    %c0_8 = arith.constant 0 : index
    %c0_9 = arith.constant 0 : index
    %c0_10 = arith.constant 0 : index
    %c0_11 = arith.constant 0 : index
    %20 = vector.load %arg1[%c0_8, %c0_9, %c0_10, %c0_11] : memref<1x8x8x32xf32, #tpu.memory_space<vmem>>, vector<1x8x8x32xf32>
    %21 = vector.shape_cast %20 : vector<1x8x8x32xf32> to vector<64x32xf32>
    %22 = vector.broadcast %17 : vector<1x32xf32> to vector<64x32xf32>
    %23 = arith.mulf %21, %22 : vector<64x32xf32>
    %24 = vector.broadcast %19 : vector<1x32xf32> to vector<64x32xf32>
    %25 = arith.addf %23, %24 : vector<64x32xf32>
    %cst_12 = arith.constant 0.000000e+00 : f32
    %26 = vector.broadcast %cst_12 : f32 to vector<64x32xf32>
    %27 = arith.maximumf %25, %26 : vector<64x32xf32>
    %28 = vector.shape_cast %27 : vector<64x32xf32> to vector<1x8x8x32xf32>
    %c0_13 = arith.constant 0 : index
    %c1 = arith.constant 1 : index
    %c1_14 = arith.constant 1 : index
    %c0_15 = arith.constant 0 : index
    %29 = vector.load %arg8[%c0_13, %c1, %c1_14, %c0_15] : memref<1x10x10x32xf32, #tpu.memory_space<vmem>>, vector<1x8x8x32xf32>
    tpu.vector_store %arg8[%c0_13, %c1, %c1_14, %c0_15], %28 {strides = array<i32>} : memref<1x10x10x32xf32, #tpu.memory_space<vmem>>, vector<1x8x8x32xf32>,
    %c0_16 = arith.constant 0 : index
    %c0_17 = arith.constant 0 : index
    %c0_18 = arith.constant 0 : index
    %c0_19 = arith.constant 0 : index
    %30 = vector.load %arg8[%c0_16, %c0_17, %c0_18, %c0_19] : memref<1x10x10x32xf32, #tpu.memory_space<vmem>>, vector<1x8x8x32xf32>
    %31 = vector.shape_cast %30 : vector<1x8x8x32xf32> to vector<64x32xf32>
    %c0_20 = arith.constant 0 : index
    %c0_21 = arith.constant 0 : index
    %c1_22 = arith.constant 1 : index
    %c0_23 = arith.constant 0 : index
    %32 = vector.load %arg8[%c0_20, %c0_21, %c1_22, %c0_23] : memref<1x10x10x32xf32, #tpu.memory_space<vmem>>, vector<1x8x8x32xf32>
    %33 = vector.shape_cast %32 : vector<1x8x8x32xf32> to vector<64x32xf32>
    %c0_24 = arith.constant 0 : index
    %c0_25 = arith.constant 0 : index
    %c2 = arith.constant 2 : index
    %c0_26 = arith.constant 0 : index
    %34 = vector.load %arg8[%c0_24, %c0_25, %c2, %c0_26] : memref<1x10x10x32xf32, #tpu.memory_space<vmem>>, vector<1x8x8x32xf32>
    %35 = vector.shape_cast %34 : vector<1x8x8x32xf32> to vector<64x32xf32>
    %c0_27 = arith.constant 0 : index
    %c1_28 = arith.constant 1 : index
    %c0_29 = arith.constant 0 : index
    %c0_30 = arith.constant 0 : index
    %36 = vector.load %arg8[%c0_27, %c1_28, %c0_29, %c0_30] : memref<1x10x10x32xf32, #tpu.memory_space<vmem>>, vector<1x8x8x32xf32>
    %37 = vector.shape_cast %36 : vector<1x8x8x32xf32> to vector<64x32xf32>
    %c0_31 = arith.constant 0 : index
    %c1_32 = arith.constant 1 : index
    %c1_33 = arith.constant 1 : index
    %c0_34 = arith.constant 0 : index
    %38 = vector.load %arg8[%c0_31, %c1_32, %c1_33, %c0_34] : memref<1x10x10x32xf32, #tpu.memory_space<vmem>>, vector<1x8x8x32xf32>
    %39 = vector.shape_cast %38 : vector<1x8x8x32xf32> to vector<64x32xf32>
    %c0_35 = arith.constant 0 : index
    %c1_36 = arith.constant 1 : index
    %c2_37 = arith.constant 2 : index
    %c0_38 = arith.constant 0 : index
    %40 = vector.load %arg8[%c0_35, %c1_36, %c2_37, %c0_38] : memref<1x10x10x32xf32, #tpu.memory_space<vmem>>, vector<1x8x8x32xf32>
    %41 = vector.shape_cast %40 : vector<1x8x8x32xf32> to vector<64x32xf32>
    %c0_39 = arith.constant 0 : index
    %c2_40 = arith.constant 2 : index
    %c0_41 = arith.constant 0 : index
    %c0_42 = arith.constant 0 : index
    %42 = vector.load %arg8[%c0_39, %c2_40, %c0_41, %c0_42] : memref<1x10x10x32xf32, #tpu.memory_space<vmem>>, vector<1x8x8x32xf32>
    %43 = vector.shape_cast %42 : vector<1x8x8x32xf32> to vector<64x32xf32>
    %c0_43 = arith.constant 0 : index
    %c2_44 = arith.constant 2 : index
    %c1_45 = arith.constant 1 : index
    %c0_46 = arith.constant 0 : index
    %44 = vector.load %arg8[%c0_43, %c2_44, %c1_45, %c0_46] : memref<1x10x10x32xf32, #tpu.memory_space<vmem>>, vector<1x8x8x32xf32>
    %45 = vector.shape_cast %44 : vector<1x8x8x32xf32> to vector<64x32xf32>
    %c0_47 = arith.constant 0 : index
    %c2_48 = arith.constant 2 : index
    %c2_49 = arith.constant 2 : index
    %c0_50 = arith.constant 0 : index
    %46 = vector.load %arg8[%c0_47, %c2_48, %c2_49, %c0_50] : memref<1x10x10x32xf32, #tpu.memory_space<vmem>>, vector<1x8x8x32xf32>
    %47 = vector.shape_cast %46 : vector<1x8x8x32xf32> to vector<64x32xf32>
    %48 = tpu.concatenate %31, %33, %35, %37, %39, %41, %43, %45, %47 in 1 : vector<64x32xf32>, vector<64x32xf32>, vector<64x32xf32>, vector<64x32xf32>, vector<64x32xf32>, vector<64x32xf32>, vector<64x32xf32>, vector<64x32xf32>, vector<64x32xf32> -> vector<64x288xf32>
    %49 = arith.truncf %48 : vector<64x288xf32> to vector<64x288xbf16>
    %c0_51 = arith.constant 0 : index
    %c0_52 = arith.constant 0 : index
    %50 = vector.load %arg5[%c0_51, %c0_52] : memref<288x32xbf16, #tpu.memory_space<vmem>>, vector<288x32xbf16>
    %cst_53 = arith.constant dense<0.000000e+00> : vector<64x32xf32>
    %51 = tpu.matmul %49, %50, %cst_53 {dimension_numbers = #tpu.dot_dimension_numbers<[1], [0], [0], [1], [0, 0, 1, 1], [], []>} : vector<64x288xbf16>, vector<288x32xbf16>, vector<64x32xf32> -> vector<64x32xf32>
    %52 = vector.shape_cast %51 : vector<64x32xf32> to vector<1x8x8x32xf32>
    %c0_54 = arith.constant 0 : index
    %c0_55 = arith.constant 0 : index
    %c0_56 = arith.constant 0 : index
    %c0_57 = arith.constant 0 : index
    %53 = vector.load %arg6[%c0_54, %c0_55, %c0_56, %c0_57] : memref<1x8x8x32xf32, #tpu.memory_space<vmem>>, vector<1x8x8x32xf32>
    tpu.vector_store %arg6[%c0_54, %c0_55, %c0_56, %c0_57], %52 {strides = array<i32>} : memref<1x8x8x32xf32, #tpu.memory_space<vmem>>, vector<1x8x8x32xf32>,
    %c0_58 = arith.constant 0 : index
    %c0_59 = arith.constant 0 : index
    %54 = vector.load %arg7[%c0_58, %c0_59] : memref<2x32xf32, #tpu.memory_space<vmem>>, vector<2x32xf32>
    %cst_60 = arith.constant dense<0.000000e+00> : vector<32xf32>
    %55 = vector.multi_reduction <add>, %51, %cst_60 [0] : vector<64x32xf32> to vector<32xf32>
    %56 = vector.shape_cast %55 : vector<32xf32> to vector<1x32xf32>
    %57 = arith.mulf %51, %51 : vector<64x32xf32>
    %cst_61 = arith.constant dense<0.000000e+00> : vector<32xf32>
    %58 = vector.multi_reduction <add>, %57, %cst_61 [0] : vector<64x32xf32> to vector<32xf32>
    %59 = vector.shape_cast %58 : vector<32xf32> to vector<1x32xf32>
    %60 = tpu.concatenate %56, %59 in 0 : vector<1x32xf32>, vector<1x32xf32> -> vector<2x32xf32>
    %61 = arith.addf %54, %60 : vector<2x32xf32>
    %c0_62 = arith.constant 0 : index
    %c0_63 = arith.constant 0 : index
    %62 = vector.load %arg7[%c0_62, %c0_63] : memref<2x32xf32, #tpu.memory_space<vmem>>, vector<2x32xf32>
    tpu.vector_store %arg7[%c0_62, %c0_63], %61 {strides = array<i32>} : memref<2x32xf32, #tpu.memory_space<vmem>>, vector<2x32xf32>,
    return
  }
  func.func @transform_0(%arg0: i32) -> (i32, i32, i32, i32) {
    %c0_i32 = arith.constant 0 : i32
    %c0_i32_0 = arith.constant 0 : i32
    %c0_i32_1 = arith.constant 0 : i32
    %c0_i32_2 = arith.constant 0 : i32
    return %arg0, %c0_i32, %c0_i32_0, %c0_i32_1 : i32, i32, i32, i32
  }
  func.func @transform_1(%arg0: i32) -> (i32, i32) {
    %c0_i32 = arith.constant 0 : i32
    %c0_i32_0 = arith.constant 0 : i32
    %c0_i32_1 = arith.constant 0 : i32
    return %c0_i32, %c0_i32_0 : i32, i32
  }
  func.func @transform_2(%arg0: i32) -> (i32, i32) {
    %c0_i32 = arith.constant 0 : i32
    %c0_i32_0 = arith.constant 0 : i32
    %c0_i32_1 = arith.constant 0 : i32
    return %c0_i32, %c0_i32_0 : i32, i32
  }
  func.func @transform_3(%arg0: i32) -> (i32, i32) {
    %c0_i32 = arith.constant 0 : i32
    %c0_i32_0 = arith.constant 0 : i32
    %c0_i32_1 = arith.constant 0 : i32
    return %c0_i32, %c0_i32_0 : i32, i32
  }
  func.func @transform_4(%arg0: i32) -> (i32, i32) {
    %c0_i32 = arith.constant 0 : i32
    %c0_i32_0 = arith.constant 0 : i32
    %c0_i32_1 = arith.constant 0 : i32
    return %c0_i32, %c0_i32_0 : i32, i32
  }
  func.func @transform_5(%arg0: i32) -> (i32, i32, i32, i32) {
    %c0_i32 = arith.constant 0 : i32
    %c0_i32_0 = arith.constant 0 : i32
    %c0_i32_1 = arith.constant 0 : i32
    %c0_i32_2 = arith.constant 0 : i32
    return %arg0, %c0_i32, %c0_i32_0, %c0_i32_1 : i32, i32, i32, i32
  }
  func.func @transform_6(%arg0: i32) -> (i32, i32) {
    %c0_i32 = arith.constant 0 : i32
    %c0_i32_0 = arith.constant 0 : i32
    %c0_i32_1 = arith.constant 0 : i32
    return %c0_i32, %c0_i32_0 : i32, i32
  }
}

module attributes {stable_mosaic.version = 11 : i64} {
  func.func @conv1_kernel(%arg0: i32, %arg1: memref<1x8x8x128xf32, #tpu.memory_space<vmem>>, %arg2: memref<128x32xbf16, #tpu.memory_space<vmem>>, %arg3: memref<1x8x8x32xf32, #tpu.memory_space<vmem>>, %arg4: memref<2x32xf32, #tpu.memory_space<vmem>>) attributes {dimension_semantics = [#tpu.dimension_semantics<arbitrary>], iteration_bounds = array<i64: 2>, scalar_prefetch = 0 : i64, scratch_operands = 0 : i64, tpu.core_type = #tpu.core_type<tc>, window_params = [{transform_indices = @transform_0, window_bounds = array<i64: 1, 8, 8, 128>}, {pipeline_mode = #tpu.pipeline_mode<synchronous>, transform_indices = @transform_1, window_bounds = array<i64: 128, 32>}, {transform_indices = @transform_2, window_bounds = array<i64: 1, 8, 8, 32>}, {pipeline_mode = #tpu.pipeline_mode<synchronous>, transform_indices = @transform_3, window_bounds = array<i64: 2, 32>}]} {
    %c0_i32 = arith.constant 0 : i32
    %0 = arith.cmpi eq, %arg0, %c0_i32 : i32
    %1 = arith.extui %0 : i1 to i32
    %c0_i32_0 = arith.constant 0 : i32
    %2 = arith.cmpi ne, %1, %c0_i32_0 : i32
    scf.if %2 {
      %cst_16 = arith.constant 0.000000e+00 : f32
      %19 = vector.broadcast %cst_16 : f32 to vector<2x32xf32>
      %c0_17 = arith.constant 0 : index
      %c0_18 = arith.constant 0 : index
      %20 = vector.load %arg4[%c0_17, %c0_18] : memref<2x32xf32, #tpu.memory_space<vmem>>, vector<2x32xf32>
      tpu.vector_store %arg4[%c0_17, %c0_18], %19 {strides = array<i32>} : memref<2x32xf32, #tpu.memory_space<vmem>>, vector<2x32xf32>,
    } else {
    }
    %c0 = arith.constant 0 : index
    %c0_1 = arith.constant 0 : index
    %c0_2 = arith.constant 0 : index
    %c0_3 = arith.constant 0 : index
    %3 = vector.load %arg1[%c0, %c0_1, %c0_2, %c0_3] : memref<1x8x8x128xf32, #tpu.memory_space<vmem>>, vector<1x8x8x128xf32>
    %4 = vector.shape_cast %3 : vector<1x8x8x128xf32> to vector<64x128xf32>
    %5 = arith.truncf %4 : vector<64x128xf32> to vector<64x128xbf16>
    %c0_4 = arith.constant 0 : index
    %c0_5 = arith.constant 0 : index
    %6 = vector.load %arg2[%c0_4, %c0_5] : memref<128x32xbf16, #tpu.memory_space<vmem>>, vector<128x32xbf16>
    %cst = arith.constant dense<0.000000e+00> : vector<64x32xf32>
    %7 = tpu.matmul %5, %6, %cst {dimension_numbers = #tpu.dot_dimension_numbers<[1], [0], [0], [1], [0, 0, 1, 1], [], []>} : vector<64x128xbf16>, vector<128x32xbf16>, vector<64x32xf32> -> vector<64x32xf32>
    %8 = vector.shape_cast %7 : vector<64x32xf32> to vector<1x8x8x32xf32>
    %c0_6 = arith.constant 0 : index
    %c0_7 = arith.constant 0 : index
    %c0_8 = arith.constant 0 : index
    %c0_9 = arith.constant 0 : index
    %9 = vector.load %arg3[%c0_6, %c0_7, %c0_8, %c0_9] : memref<1x8x8x32xf32, #tpu.memory_space<vmem>>, vector<1x8x8x32xf32>
    tpu.vector_store %arg3[%c0_6, %c0_7, %c0_8, %c0_9], %8 {strides = array<i32>} : memref<1x8x8x32xf32, #tpu.memory_space<vmem>>, vector<1x8x8x32xf32>,
    %c0_10 = arith.constant 0 : index
    %c0_11 = arith.constant 0 : index
    %10 = vector.load %arg4[%c0_10, %c0_11] : memref<2x32xf32, #tpu.memory_space<vmem>>, vector<2x32xf32>
    %cst_12 = arith.constant dense<0.000000e+00> : vector<32xf32>
    %11 = vector.multi_reduction <add>, %7, %cst_12 [0] : vector<64x32xf32> to vector<32xf32>
    %12 = vector.shape_cast %11 : vector<32xf32> to vector<1x32xf32>
    %13 = arith.mulf %7, %7 : vector<64x32xf32>
    %cst_13 = arith.constant dense<0.000000e+00> : vector<32xf32>
    %14 = vector.multi_reduction <add>, %13, %cst_13 [0] : vector<64x32xf32> to vector<32xf32>
    %15 = vector.shape_cast %14 : vector<32xf32> to vector<1x32xf32>
    %16 = tpu.concatenate %12, %15 in 0 : vector<1x32xf32>, vector<1x32xf32> -> vector<2x32xf32>
    %17 = arith.addf %10, %16 : vector<2x32xf32>
    %c0_14 = arith.constant 0 : index
    %c0_15 = arith.constant 0 : index
    %18 = vector.load %arg4[%c0_14, %c0_15] : memref<2x32xf32, #tpu.memory_space<vmem>>, vector<2x32xf32>
    tpu.vector_store %arg4[%c0_14, %c0_15], %17 {strides = array<i32>} : memref<2x32xf32, #tpu.memory_space<vmem>>, vector<2x32xf32>,
    return
  }
  func.func @transform_0(%arg0: i32) -> (i32, i32, i32, i32) {
    %c0_i32 = arith.constant 0 : i32
    %c0_i32_0 = arith.constant 0 : i32
    %c0_i32_1 = arith.constant 0 : i32
    %c0_i32_2 = arith.constant 0 : i32
    return %arg0, %c0_i32, %c0_i32_0, %c0_i32_1 : i32, i32, i32, i32
  }
  func.func @transform_1(%arg0: i32) -> (i32, i32) {
    %c0_i32 = arith.constant 0 : i32
    %c0_i32_0 = arith.constant 0 : i32
    %c0_i32_1 = arith.constant 0 : i32
    return %c0_i32, %c0_i32_0 : i32, i32
  }
  func.func @transform_2(%arg0: i32) -> (i32, i32, i32, i32) {
    %c0_i32 = arith.constant 0 : i32
    %c0_i32_0 = arith.constant 0 : i32
    %c0_i32_1 = arith.constant 0 : i32
    %c0_i32_2 = arith.constant 0 : i32
    return %arg0, %c0_i32, %c0_i32_0, %c0_i32_1 : i32, i32, i32, i32
  }
  func.func @transform_3(%arg0: i32) -> (i32, i32) {
    %c0_i32 = arith.constant 0 : i32
    %c0_i32_0 = arith.constant 0 : i32
    %c0_i32_1 = arith.constant 0 : i32
    return %c0_i32, %c0_i32_0 : i32, i32
  }
}

module attributes {stable_mosaic.version = 11 : i64} {
  func.func @bn3_res_kernel(%arg0: i32, %arg1: memref<1x8x8x128xf32, #tpu.memory_space<vmem>>, %arg2: memref<2x128xf32, #tpu.memory_space<vmem>>, %arg3: memref<1x128xf32, #tpu.memory_space<vmem>>, %arg4: memref<1x128xf32, #tpu.memory_space<vmem>>, %arg5: memref<1x8x8x128xf32, #tpu.memory_space<vmem>>, %arg6: memref<1x8x8x128xf32, #tpu.memory_space<vmem>>) attributes {dimension_semantics = [#tpu.dimension_semantics<parallel>], iteration_bounds = array<i64: 2>, scalar_prefetch = 0 : i64, scratch_operands = 0 : i64, tpu.core_type = #tpu.core_type<tc>, window_params = [{transform_indices = @transform_0, window_bounds = array<i64: 1, 8, 8, 128>}, {pipeline_mode = #tpu.pipeline_mode<synchronous>, transform_indices = @transform_1, window_bounds = array<i64: 2, 128>}, {pipeline_mode = #tpu.pipeline_mode<synchronous>, transform_indices = @transform_2, window_bounds = array<i64: 1, 128>}, {pipeline_mode = #tpu.pipeline_mode<synchronous>, transform_indices = @transform_3, window_bounds = array<i64: 1, 128>}, {transform_indices = @transform_4, window_bounds = array<i64: 1, 8, 8, 128>}, {transform_indices = @transform_5, window_bounds = array<i64: 1, 8, 8, 128>}]} {
    %c0 = arith.constant 0 : index
    %c0_0 = arith.constant 0 : index
    %0 = vector.load %arg2[%c0, %c0_0] : memref<2x128xf32, #tpu.memory_space<vmem>>, vector<2x128xf32>
    %c0_1 = arith.constant 0 : index
    %c0_2 = arith.constant 0 : index
    %1 = vector.load %arg3[%c0_1, %c0_2] : memref<1x128xf32, #tpu.memory_space<vmem>>, vector<1x128xf32>
    %c0_3 = arith.constant 0 : index
    %c0_4 = arith.constant 0 : index
    %2 = vector.load %arg4[%c0_3, %c0_4] : memref<1x128xf32, #tpu.memory_space<vmem>>, vector<1x128xf32>
    %3 = vector.extract_strided_slice %0 {offsets = [0, 0], sizes = [1, 128], strides = [1, 1]} : vector<2x128xf32> to vector<1x128xf32>
    %cst = arith.constant 7.812500e-03 : f32
    %4 = vector.broadcast %cst : f32 to vector<1x128xf32>
    %5 = arith.mulf %3, %4 : vector<1x128xf32>
    %6 = vector.extract_strided_slice %0 {offsets = [1, 0], sizes = [1, 128], strides = [1, 1]} : vector<2x128xf32> to vector<1x128xf32>
    %cst_5 = arith.constant 7.812500e-03 : f32
    %7 = vector.broadcast %cst_5 : f32 to vector<1x128xf32>
    %8 = arith.mulf %6, %7 : vector<1x128xf32>
    %9 = arith.mulf %5, %5 : vector<1x128xf32>
    %10 = arith.subf %8, %9 : vector<1x128xf32>
    %cst_6 = arith.constant 9.99999974E-6 : f32
    %11 = vector.broadcast %cst_6 : f32 to vector<1x128xf32>
    %12 = arith.addf %10, %11 : vector<1x128xf32>
    %13 = math.rsqrt %12 : vector<1x128xf32>
    %14 = arith.mulf %1, %13 : vector<1x128xf32>
    %15 = arith.mulf %5, %14 : vector<1x128xf32>
    %16 = arith.subf %2, %15 : vector<1x128xf32>
    %c0_7 = arith.constant 0 : index
    %c0_8 = arith.constant 0 : index
    %c0_9 = arith.constant 0 : index
    %c0_10 = arith.constant 0 : index
    %17 = vector.load %arg1[%c0_7, %c0_8, %c0_9, %c0_10] : memref<1x8x8x128xf32, #tpu.memory_space<vmem>>, vector<1x8x8x128xf32>
    %18 = vector.shape_cast %17 : vector<1x8x8x128xf32> to vector<64x128xf32>
    %19 = vector.broadcast %14 : vector<1x128xf32> to vector<64x128xf32>
    %20 = arith.mulf %18, %19 : vector<64x128xf32>
    %21 = vector.broadcast %16 : vector<1x128xf32> to vector<64x128xf32>
    %22 = arith.addf %20, %21 : vector<64x128xf32>
    %c0_11 = arith.constant 0 : index
    %c0_12 = arith.constant 0 : index
    %c0_13 = arith.constant 0 : index
    %c0_14 = arith.constant 0 : index
    %23 = vector.load %arg5[%c0_11, %c0_12, %c0_13, %c0_14] : memref<1x8x8x128xf32, #tpu.memory_space<vmem>>, vector<1x8x8x128xf32>
    %24 = vector.shape_cast %23 : vector<1x8x8x128xf32> to vector<64x128xf32>
    %25 = arith.addf %22, %24 : vector<64x128xf32>
    %cst_15 = arith.constant 0.000000e+00 : f32
    %26 = vector.broadcast %cst_15 : f32 to vector<64x128xf32>
    %27 = arith.maximumf %25, %26 : vector<64x128xf32>
    %28 = vector.shape_cast %27 : vector<64x128xf32> to vector<1x8x8x128xf32>
    %c0_16 = arith.constant 0 : index
    %c0_17 = arith.constant 0 : index
    %c0_18 = arith.constant 0 : index
    %c0_19 = arith.constant 0 : index
    %29 = vector.load %arg6[%c0_16, %c0_17, %c0_18, %c0_19] : memref<1x8x8x128xf32, #tpu.memory_space<vmem>>, vector<1x8x8x128xf32>
    tpu.vector_store %arg6[%c0_16, %c0_17, %c0_18, %c0_19], %28 {strides = array<i32>} : memref<1x8x8x128xf32, #tpu.memory_space<vmem>>, vector<1x8x8x128xf32>,
    return
  }
  func.func @transform_0(%arg0: i32) -> (i32, i32, i32, i32) {
    %c0_i32 = arith.constant 0 : i32
    %c0_i32_0 = arith.constant 0 : i32
    %c0_i32_1 = arith.constant 0 : i32
    %c0_i32_2 = arith.constant 0 : i32
    return %arg0, %c0_i32, %c0_i32_0, %c0_i32_1 : i32, i32, i32, i32
  }
  func.func @transform_1(%arg0: i32) -> (i32, i32) {
    %c0_i32 = arith.constant 0 : i32
    %c0_i32_0 = arith.constant 0 : i32
    %c0_i32_1 = arith.constant 0 : i32
    return %c0_i32, %c0_i32_0 : i32, i32
  }
  func.func @transform_2(%arg0: i32) -> (i32, i32) {
    %c0_i32 = arith.constant 0 : i32
    %c0_i32_0 = arith.constant 0 : i32
    %c0_i32_1 = arith.constant 0 : i32
    return %c0_i32, %c0_i32_0 : i32, i32
  }
  func.func @transform_3(%arg0: i32) -> (i32, i32) {
    %c0_i32 = arith.constant 0 : i32
    %c0_i32_0 = arith.constant 0 : i32
    %c0_i32_1 = arith.constant 0 : i32
    return %c0_i32, %c0_i32_0 : i32, i32
  }
  func.func @transform_4(%arg0: i32) -> (i32, i32, i32, i32) {
    %c0_i32 = arith.constant 0 : i32
    %c0_i32_0 = arith.constant 0 : i32
    %c0_i32_1 = arith.constant 0 : i32
    %c0_i32_2 = arith.constant 0 : i32
    return %arg0, %c0_i32, %c0_i32_0, %c0_i32_1 : i32, i32, i32, i32
  }
  func.func @transform_5(%arg0: i32) -> (i32, i32, i32, i32) {
    %c0_i32 = arith.constant 0 : i32
    %c0_i32_0 = arith.constant 0 : i32
    %c0_i32_1 = arith.constant 0 : i32
    %c0_i32_2 = arith.constant 0 : i32
    return %arg0, %c0_i32, %c0_i32_0, %c0_i32_1 : i32, i32, i32, i32
  }
}

module attributes {stable_mosaic.version = 11 : i64} {
  func.func @conv3_kernel(%arg0: i32, %arg1: memref<1x8x8x32xf32, #tpu.memory_space<vmem>>, %arg2: memref<2x32xf32, #tpu.memory_space<vmem>>, %arg3: memref<1x32xf32, #tpu.memory_space<vmem>>, %arg4: memref<1x32xf32, #tpu.memory_space<vmem>>, %arg5: memref<32x128xbf16, #tpu.memory_space<vmem>>, %arg6: memref<1x8x8x128xf32, #tpu.memory_space<vmem>>, %arg7: memref<2x128xf32, #tpu.memory_space<vmem>>) attributes {dimension_semantics = [#tpu.dimension_semantics<arbitrary>], iteration_bounds = array<i64: 2>, scalar_prefetch = 0 : i64, scratch_operands = 0 : i64, tpu.core_type = #tpu.core_type<tc>, window_params = [{transform_indices = @transform_0, window_bounds = array<i64: 1, 8, 8, 32>}, {pipeline_mode = #tpu.pipeline_mode<synchronous>, transform_indices = @transform_1, window_bounds = array<i64: 2, 32>}, {pipeline_mode = #tpu.pipeline_mode<synchronous>, transform_indices = @transform_2, window_bounds = array<i64: 1, 32>}, {pipeline_mode = #tpu.pipeline_mode<synchronous>, transform_indices = @transform_3, window_bounds = array<i64: 1, 32>}, {pipeline_mode = #tpu.pipeline_mode<synchronous>, transform_indices = @transform_4, window_bounds = array<i64: 32, 128>}, {transform_indices = @transform_5, window_bounds = array<i64: 1, 8, 8, 128>}, {pipeline_mode = #tpu.pipeline_mode<synchronous>, transform_indices = @transform_6, window_bounds = array<i64: 2, 128>}]} {
    %c0_i32 = arith.constant 0 : i32
    %0 = arith.cmpi eq, %arg0, %c0_i32 : i32
    %1 = arith.extui %0 : i1 to i32
    %c0_i32_0 = arith.constant 0 : i32
    %2 = arith.cmpi ne, %1, %c0_i32_0 : i32
    scf.if %2 {
      %cst_26 = arith.constant 0.000000e+00 : f32
      %42 = vector.broadcast %cst_26 : f32 to vector<2x128xf32>
      %c0_27 = arith.constant 0 : index
      %c0_28 = arith.constant 0 : index
      %43 = vector.load %arg7[%c0_27, %c0_28] : memref<2x128xf32, #tpu.memory_space<vmem>>, vector<2x128xf32>
      tpu.vector_store %arg7[%c0_27, %c0_28], %42 {strides = array<i32>} : memref<2x128xf32, #tpu.memory_space<vmem>>, vector<2x128xf32>,
    } else {
    }
    %c0 = arith.constant 0 : index
    %c0_1 = arith.constant 0 : index
    %3 = vector.load %arg2[%c0, %c0_1] : memref<2x32xf32, #tpu.memory_space<vmem>>, vector<2x32xf32>
    %c0_2 = arith.constant 0 : index
    %c0_3 = arith.constant 0 : index
    %4 = vector.load %arg3[%c0_2, %c0_3] : memref<1x32xf32, #tpu.memory_space<vmem>>, vector<1x32xf32>
    %c0_4 = arith.constant 0 : index
    %c0_5 = arith.constant 0 : index
    %5 = vector.load %arg4[%c0_4, %c0_5] : memref<1x32xf32, #tpu.memory_space<vmem>>, vector<1x32xf32>
    %6 = vector.extract_strided_slice %3 {offsets = [0, 0], sizes = [1, 32], strides = [1, 1]} : vector<2x32xf32> to vector<1x32xf32>
    %cst = arith.constant 7.812500e-03 : f32
    %7 = vector.broadcast %cst : f32 to vector<1x32xf32>
    %8 = arith.mulf %6, %7 : vector<1x32xf32>
    %9 = vector.extract_strided_slice %3 {offsets = [1, 0], sizes = [1, 32], strides = [1, 1]} : vector<2x32xf32> to vector<1x32xf32>
    %cst_6 = arith.constant 7.812500e-03 : f32
    %10 = vector.broadcast %cst_6 : f32 to vector<1x32xf32>
    %11 = arith.mulf %9, %10 : vector<1x32xf32>
    %12 = arith.mulf %8, %8 : vector<1x32xf32>
    %13 = arith.subf %11, %12 : vector<1x32xf32>
    %cst_7 = arith.constant 9.99999974E-6 : f32
    %14 = vector.broadcast %cst_7 : f32 to vector<1x32xf32>
    %15 = arith.addf %13, %14 : vector<1x32xf32>
    %16 = math.rsqrt %15 : vector<1x32xf32>
    %17 = arith.mulf %4, %16 : vector<1x32xf32>
    %18 = arith.mulf %8, %17 : vector<1x32xf32>
    %19 = arith.subf %5, %18 : vector<1x32xf32>
    %c0_8 = arith.constant 0 : index
    %c0_9 = arith.constant 0 : index
    %c0_10 = arith.constant 0 : index
    %c0_11 = arith.constant 0 : index
    %20 = vector.load %arg1[%c0_8, %c0_9, %c0_10, %c0_11] : memref<1x8x8x32xf32, #tpu.memory_space<vmem>>, vector<1x8x8x32xf32>
    %21 = vector.shape_cast %20 : vector<1x8x8x32xf32> to vector<64x32xf32>
    %22 = vector.broadcast %17 : vector<1x32xf32> to vector<64x32xf32>
    %23 = arith.mulf %21, %22 : vector<64x32xf32>
    %24 = vector.broadcast %19 : vector<1x32xf32> to vector<64x32xf32>
    %25 = arith.addf %23, %24 : vector<64x32xf32>
    %cst_12 = arith.constant 0.000000e+00 : f32
    %26 = vector.broadcast %cst_12 : f32 to vector<64x32xf32>
    %27 = arith.maximumf %25, %26 : vector<64x32xf32>
    %28 = arith.truncf %27 : vector<64x32xf32> to vector<64x32xbf16>
    %c0_13 = arith.constant 0 : index
    %c0_14 = arith.constant 0 : index
    %29 = vector.load %arg5[%c0_13, %c0_14] : memref<32x128xbf16, #tpu.memory_space<vmem>>, vector<32x128xbf16>
    %cst_15 = arith.constant dense<0.000000e+00> : vector<64x128xf32>
    %30 = tpu.matmul %28, %29, %cst_15 {dimension_numbers = #tpu.dot_dimension_numbers<[1], [0], [0], [1], [0, 0, 1, 1], [], []>} : vector<64x32xbf16>, vector<32x128xbf16>, vector<64x128xf32> -> vector<64x128xf32>
    %31 = vector.shape_cast %30 : vector<64x128xf32> to vector<1x8x8x128xf32>
    %c0_16 = arith.constant 0 : index
    %c0_17 = arith.constant 0 : index
    %c0_18 = arith.constant 0 : index
    %c0_19 = arith.constant 0 : index
    %32 = vector.load %arg6[%c0_16, %c0_17, %c0_18, %c0_19] : memref<1x8x8x128xf32, #tpu.memory_space<vmem>>, vector<1x8x8x128xf32>
    tpu.vector_store %arg6[%c0_16, %c0_17, %c0_18, %c0_19], %31 {strides = array<i32>} : memref<1x8x8x128xf32, #tpu.memory_space<vmem>>, vector<1x8x8x128xf32>,
    %c0_20 = arith.constant 0 : index
    %c0_21 = arith.constant 0 : index
    %33 = vector.load %arg7[%c0_20, %c0_21] : memref<2x128xf32, #tpu.memory_space<vmem>>, vector<2x128xf32>
    %cst_22 = arith.constant dense<0.000000e+00> : vector<128xf32>
    %34 = vector.multi_reduction <add>, %30, %cst_22 [0] : vector<64x128xf32> to vector<128xf32>
    %35 = vector.shape_cast %34 : vector<128xf32> to vector<1x128xf32>
    %36 = arith.mulf %30, %30 : vector<64x128xf32>
    %cst_23 = arith.constant dense<0.000000e+00> : vector<128xf32>
    %37 = vector.multi_reduction <add>, %36, %cst_23 [0] : vector<64x128xf32> to vector<128xf32>
    %38 = vector.shape_cast %37 : vector<128xf32> to vector<1x128xf32>
    %39 = tpu.concatenate %35, %38 in 0 : vector<1x128xf32>, vector<1x128xf32> -> vector<2x128xf32>
    %40 = arith.addf %33, %39 : vector<2x128xf32>
    %c0_24 = arith.constant 0 : index
    %c0_25 = arith.constant 0 : index
    %41 = vector.load %arg7[%c0_24, %c0_25] : memref<2x128xf32, #tpu.memory_space<vmem>>, vector<2x128xf32>
    tpu.vector_store %arg7[%c0_24, %c0_25], %40 {strides = array<i32>} : memref<2x128xf32, #tpu.memory_space<vmem>>, vector<2x128xf32>,
    return
  }
  func.func @transform_0(%arg0: i32) -> (i32, i32, i32, i32) {
    %c0_i32 = arith.constant 0 : i32
    %c0_i32_0 = arith.constant 0 : i32
    %c0_i32_1 = arith.constant 0 : i32
    %c0_i32_2 = arith.constant 0 : i32
    return %arg0, %c0_i32, %c0_i32_0, %c0_i32_1 : i32, i32, i32, i32
  }
  func.func @transform_1(%arg0: i32) -> (i32, i32) {
    %c0_i32 = arith.constant 0 : i32
    %c0_i32_0 = arith.constant 0 : i32
    %c0_i32_1 = arith.constant 0 : i32
    return %c0_i32, %c0_i32_0 : i32, i32
  }
  func.func @transform_2(%arg0: i32) -> (i32, i32) {
    %c0_i32 = arith.constant 0 : i32
    %c0_i32_0 = arith.constant 0 : i32
    %c0_i32_1 = arith.constant 0 : i32
    return %c0_i32, %c0_i32_0 : i32, i32
  }
  func.func @transform_3(%arg0: i32) -> (i32, i32) {
    %c0_i32 = arith.constant 0 : i32
    %c0_i32_0 = arith.constant 0 : i32
    %c0_i32_1 = arith.constant 0 : i32
    return %c0_i32, %c0_i32_0 : i32, i32
  }
  func.func @transform_4(%arg0: i32) -> (i32, i32) {
    %c0_i32 = arith.constant 0 : i32
    %c0_i32_0 = arith.constant 0 : i32
    %c0_i32_1 = arith.constant 0 : i32
    return %c0_i32, %c0_i32_0 : i32, i32
  }
  func.func @transform_5(%arg0: i32) -> (i32, i32, i32, i32) {
    %c0_i32 = arith.constant 0 : i32
    %c0_i32_0 = arith.constant 0 : i32
    %c0_i32_1 = arith.constant 0 : i32
    %c0_i32_2 = arith.constant 0 : i32
    return %arg0, %c0_i32, %c0_i32_0, %c0_i32_1 : i32, i32, i32, i32
  }
  func.func @transform_6(%arg0: i32) -> (i32, i32) {
    %c0_i32 = arith.constant 0 : i32
    %c0_i32_0 = arith.constant 0 : i32
    %c0_i32_1 = arith.constant 0 : i32
    return %c0_i32, %c0_i32_0 : i32, i32
  }
}

</mosaic_0001>

<llo_original>
// kernel: bottleneck_forward.7
$region0: #{bottleneck_forward.7}
  #allocation0 [shape = 'u32[]', space=smem, size = 0x4, offset = 0x4, fixed_abs, tag = 'smem constant byte address 0x4 - core index']
  #allocation1 [shape = 'u32[144,128]{1,0:T(1,128)}', space=vmem, size = 0x12000, scoped, tag = 'internal scratch']
  %s0 = inlined_call_operand.vmem [shape: f32[2,8,8,128], index: 0, kind: input, shape index: {}]
  %s1 = inlined_call_operand.vmem [shape: f32[2,128], index: 1, kind: input, shape index: {}]
  %s2 = inlined_call_operand.vmem [shape: f32[1,128], index: 2, kind: input, shape index: {}]
  %s3 = inlined_call_operand.vmem [shape: f32[1,128], index: 3, kind: input, shape index: {}]
  %s4 = inlined_call_operand.vmem [shape: f32[2,8,8,128], index: 4, kind: input, shape index: {}]
  %s5 = inlined_call_operand.hbm [shape: f32[2,8,8,128], index: 5, kind: output, shape index: {}]
  %s6 = sld [smem:[#allocation0]]
  $region53: #{bottleneck_forward.7} parent=0
    _
  %s8 = ssub.s32 1, %s6
  %s9 = scalar_select 0, %s8, %s6
  $region1: #{bottleneck_forward.7} parent=0
    #allocation2 [shape = 'u8[65536]{0}', space=vmem, size = 0x10000, scoped, tag = 'output window, operand 0']
    #allocation3 [shape = 's32[2]{0}', space=sflag, size = 0x8, scoped, tag = 'scoped memory for bottleneck_forward.7']
    %10 = vsyncpa [#allocation3], 0
    %s11 = scalar_lea.sflag [#allocation3], 1
    %12 = vsyncpa %s11, 0
    loop: start=0, step=1, limit=4
    $region2: #{bottleneck_forward.7} parent=1 // loop_pre_header
      _
    $region3: #{bottleneck_forward.7} parent=1 // loop_header
      %s14 = sphi 0, %s18
      %p15 = scmp.ge.s32.totalorder %s14, 4
      %s24 = sphi 0, %s26
      %s27 = sphi 0, %s24
      %s28 = sphi 0, %s27
      %s44 = sphi 0, %s28
      %s48 = sphi 0, %s48
      %s50 = sphi 0, %s48
      %s51 = sphi 0, %s50
      %s65 = sphi 0, %s51
      %s69 = sphi 0, %s69
      %s71 = sphi 0, %s69
      %s72 = sphi 0, %s71
      %s86 = sphi 0, %s72
      %s90 = sphi 0, %s90
      %s92 = sphi 0, %s90
      %s93 = sphi 0, %s92
      %s107 = sphi 0, %s93
      %s113 = sphi 0, %s115
      %s116 = sphi 0, %s113
      %s117 = sphi 0, %s116
      %s133 = sphi 0, %s117
      %s139 = sphi 0, %s141
      %s142 = sphi 0, %s139
      %s143 = sphi 0, %s142
      %s159 = sphi 0, %s143
    $region4: #{bottleneck_forward.7} parent=1 // loop_header_branch
      %17 = sbr.rel (%p15) target = $region8
    $region5: #{bottleneck_forward.7} parent=1 // loop_body
      %s19 = ssub.s32 %s14, 1
      %s20 = ssub.s32 %s14, 2
      %s21 = sadd.s32 %s14, 1
      %s22 = ssub.s32 %s14, %s21
      %p23 = scmp.eq.s32.totalorder %s22, 0
      %s25 = sadd.s32 %s24, 1
      %s26 = scalar_select %p23, %s24, %s25
      %p29 = pneg %p23
      %p30 = scmp.eq.s32.totalorder %s14, 1
      %p31 = por %p29, %p30
      %p32 = scmp.ne.s32.totalorder %s24, %s27
      %p33 = scmp.eq.s32.totalorder %s14, 0
      %p34 = por %p32, %p33
      %p35 = scmp.ne.s32.totalorder %s24, %s27
      %p36 = scmp.eq.s32.totalorder %s19, 1
      %p37 = por %p35, %p36
      %p38 = scmp.ne.s32.totalorder %s27, %s28
      %p39 = scmp.eq.s32.totalorder %s19, 0
      %p40 = por %p38, %p39
      %p41 = scmp.ne.s32.totalorder %s27, %s28
      %p42 = scmp.eq.s32.totalorder %s20, 1
      %p43 = por %p41, %p42
      %p45 = scmp.ne.s32.totalorder %s28, %s44
      %p46 = scmp.eq.s32.totalorder %s20, 0
      %p47 = por %p45, %p46
      %s49 = sadd.s32 %s48, 1
      %p52 = scmp.eq.s32.totalorder %s14, 1
      %p53 = scmp.ne.s32.totalorder %s48, %s50
      %p54 = scmp.eq.s32.totalorder %s14, 0
      %p55 = por %p53, %p54
      %p56 = scmp.ne.s32.totalorder %s48, %s50
      %p57 = scmp.eq.s32.totalorder %s19, 1
      %p58 = por %p56, %p57
      %p59 = scmp.ne.s32.totalorder %s50, %s51
      %p60 = scmp.eq.s32.totalorder %s19, 0
      %p61 = por %p59, %p60
      %p62 = scmp.ne.s32.totalorder %s50, %s51
      %p63 = scmp.eq.s32.totalorder %s20, 1
      %p64 = por %p62, %p63
      %p66 = scmp.ne.s32.totalorder %s51, %s65
      %p67 = scmp.eq.s32.totalorder %s20, 0
      %p68 = por %p66, %p67
      %s70 = sadd.s32 %s69, 1
      %p73 = scmp.eq.s32.totalorder %s14, 1
      %p74 = scmp.ne.s32.totalorder %s69, %s71
      %p75 = scmp.eq.s32.totalorder %s14, 0
      %p76 = por %p74, %p75
      %p77 = scmp.ne.s32.totalorder %s69, %s71
      %p78 = scmp.eq.s32.totalorder %s19, 1
      %p79 = por %p77, %p78
      %p80 = scmp.ne.s32.totalorder %s71, %s72
      %p81 = scmp.eq.s32.totalorder %s19, 0
      %p82 = por %p80, %p81
      %p83 = scmp.ne.s32.totalorder %s71, %s72
      %p84 = scmp.eq.s32.totalorder %s20, 1
      %p85 = por %p83, %p84
      %p87 = scmp.ne.s32.totalorder %s72, %s86
      %p88 = scmp.eq.s32.totalorder %s20, 0
      %p89 = por %p87, %p88
      %s91 = sadd.s32 %s90, 1
      %p94 = scmp.eq.s32.totalorder %s14, 1
      %p95 = scmp.ne.s32.totalorder %s90, %s92
      %p96 = scmp.eq.s32.totalorder %s14, 0
      %p97 = por %p95, %p96
      %p98 = scmp.ne.s32.totalorder %s90, %s92
      %p99 = scmp.eq.s32.totalorder %s19, 1
      %p100 = por %p98, %p99
      %p101 = scmp.ne.s32.totalorder %s92, %s93
      %p102 = scmp.eq.s32.totalorder %s19, 0
      %p103 = por %p101, %p102
      %p104 = scmp.ne.s32.totalorder %s92, %s93
      %p105 = scmp.eq.s32.totalorder %s20, 1
      %p106 = por %p104, %p105
      %p108 = scmp.ne.s32.totalorder %s93, %s107
      %p109 = scmp.eq.s32.totalorder %s20, 0
      %p110 = por %p108, %p109
      %s111 = ssub.s32 %s14, %s21
      %p112 = scmp.eq.s32.totalorder %s111, 0
      %s114 = sadd.s32 %s113, 1
      %s115 = scalar_select %p112, %s113, %s114
      %p118 = pneg %p112
      %p119 = scmp.eq.s32.totalorder %s14, 1
      %p120 = por %p118, %p119
      %p121 = scmp.ne.s32.totalorder %s113, %s116
      %p122 = scmp.eq.s32.totalorder %s14, 0
      %p123 = por %p121, %p122
      %p124 = scmp.ne.s32.totalorder %s113, %s116
      %p125 = scmp.eq.s32.totalorder %s19, 1
      %p126 = por %p124, %p125
      %p127 = scmp.ne.s32.totalorder %s116, %s117
      %p128 = scmp.eq.s32.totalorder %s19, 0
      %p129 = por %p127, %p128
      %p130 = scmp.ne.s32.totalorder %s116, %s117
      %p131 = scmp.eq.s32.totalorder %s20, 1
      %p132 = por %p130, %p131
      %p134 = scmp.ne.s32.totalorder %s117, %s133
      %p135 = scmp.eq.s32.totalorder %s20, 0
      %p136 = por %p134, %p135
      %s137 = ssub.s32 %s14, %s21
      %p138 = scmp.eq.s32.totalorder %s137, 0
      %s140 = sadd.s32 %s139, 1
      %s141 = scalar_select %p138, %s139, %s140
      %p144 = pneg %p138
      %p145 = scmp.eq.s32.totalorder %s14, 1
      %p146 = por %p144, %p145
      %p147 = scmp.ne.s32.totalorder %s139, %s142
      %p148 = scmp.eq.s32.totalorder %s14, 0
      %p149 = por %p147, %p148
      %p150 = scmp.ne.s32.totalorder %s139, %s142
      %p151 = scmp.eq.s32.totalorder %s19, 1
      %p152 = por %p150, %p151
      %p153 = scmp.ne.s32.totalorder %s142, %s143
      %p154 = scmp.eq.s32.totalorder %s19, 0
      %p155 = por %p153, %p154
      %p156 = scmp.ne.s32.totalorder %s142, %s143
      %p157 = scmp.eq.s32.totalorder %s20, 1
      %p158 = por %p156, %p157
      %p160 = scmp.ne.s32.totalorder %s143, %s159
      %p161 = scmp.eq.s32.totalorder %s20, 0
      %p162 = por %p160, %p161
      %p163 = scmp.le.s32.totalorder 1, %s14
      %p164 = scmp.lt.s32.totalorder %s14, 3
      %p165 = pnand %p163, %p164
      %p166 = pneg %p165
      // Predicated region
      $region9: #{bottleneck_forward.7} parent=5 // pred_check
        _
      $region10: #{bottleneck_forward.7} parent=5 // pred_check_branch
        %168 = sbr.rel (%p165) target = $region12
      $region11: #{bottleneck_forward.7} parent=5 // pred_region
        %s169 = ssub.s32 %s14, 1
        // Predicated region
        $region13: #{bottleneck_forward.7} parent=11 // pred_check
          %p170 = pneg %p61
        $region14: #{bottleneck_forward.7} parent=11 // pred_check_branch
          %172 = sbr.rel (%p170) target = $region16
        $region15: #{bottleneck_forward.7} parent=11 // pred_region
          _
        $region16: #{bottleneck_forward.7} parent=11 // pred_fallthru
          _
        // Predicated region
        $region17: #{bottleneck_forward.7} parent=11 // pred_check
          %p173 = pneg %p82
        $region18: #{bottleneck_forward.7} parent=11 // pred_check_branch
          %175 = sbr.rel (%p173) target = $region20
        $region19: #{bottleneck_forward.7} parent=11 // pred_region
          _
        $region20: #{bottleneck_forward.7} parent=11 // pred_fallthru
          _
        // Predicated region
        $region21: #{bottleneck_forward.7} parent=11 // pred_check
          %p176 = pneg %p103
        $region22: #{bottleneck_forward.7} parent=11 // pred_check_branch
          %178 = sbr.rel (%p176) target = $region24
        $region23: #{bottleneck_forward.7} parent=11 // pred_region
          _
        $region24: #{bottleneck_forward.7} parent=11 // pred_fallthru
          _
      $region12: #{bottleneck_forward.7} parent=5 // pred_fallthru
        _
      %p179 = scmp.lt.s32.totalorder %s14, 2
      // Predicated region
      $region25: #{bottleneck_forward.7} parent=5 // pred_check
        %p180 = pneg %p179
      $region26: #{bottleneck_forward.7} parent=5 // pred_check_branch
        %182 = sbr.rel (%p180) target = $region28
      $region27: #{bottleneck_forward.7} parent=5 // pred_region
        // Predicated region
        $region29: #{bottleneck_forward.7} parent=27 // pred_check
          %p183 = pneg %p34
        $region30: #{bottleneck_forward.7} parent=27 // pred_check_branch
          %185 = sbr.rel (%p183) target = $region32
        $region31: #{bottleneck_forward.7} parent=27 // pred_region
          %p186 = scmp.lt.s32.totalorder %s14, 1
          %s187 = scalar_select %p186, %s14, 1
          %s188 = smul.addr %s187, 8
          %s189 = smul.addr %s188, 8
          %s190 = scalar_lea.vmem %s0, %s189
        $region32: #{bottleneck_forward.7} parent=27 // pred_fallthru
          _
        // Predicated region
        $region33: #{bottleneck_forward.7} parent=27 // pred_check
          %p191 = pneg %p123
        $region34: #{bottleneck_forward.7} parent=27 // pred_check_branch
          %193 = sbr.rel (%p191) target = $region36
        $region35: #{bottleneck_forward.7} parent=27 // pred_region
          %p194 = scmp.lt.s32.totalorder %s14, 1
          %s195 = scalar_select %p194, %s14, 1
          %s196 = smul.addr %s195, 8
          %s197 = smul.addr %s196, 8
          %s198 = scalar_lea.vmem %s4, %s197
        $region36: #{bottleneck_forward.7} parent=27 // pred_fallthru
          _
      $region28: #{bottleneck_forward.7} parent=5 // pred_fallthru
        _
      %p199 = scmp.le.s32.totalorder 1, %s14
      %p200 = scmp.lt.s32.totalorder %s14, 3
      %p201 = pnand %p199, %p200
      %p202 = pneg %p201
      // Predicated region
      $region37: #{bottleneck_forward.7} parent=5 // pred_check
        _
      $region38: #{bottleneck_forward.7} parent=5 // pred_check_branch
        %204 = sbr.rel (%p201) target = $region40
      $region39: #{bottleneck_forward.7} parent=5 // pred_region
        %s205 = ssub.s32 %s14, 1
        %p206 = scmp.lt.s32.totalorder %s19, 1
        %s207 = scalar_select %p206, %s19, 1
        %s208 = smul.addr %s207, 8
        %s209 = smul.addr %s208, 8
        %s210 = scalar_lea.vmem %s0, %s209
        %p211 = pneg %p40
        %p212 = pneg %p37
        %p213 = pneg %p61
        %p214 = pneg %p58
        %p215 = pneg %p82
        %p216 = pneg %p79
        %p217 = pneg %p103
        %p218 = pneg %p100
        %p219 = scmp.lt.s32.totalorder %s19, 1
        %s220 = scalar_select %p219, %s19, 1
        %s221 = smul.addr %s220, 8
        %s222 = smul.addr %s221, 8
        %s223 = scalar_lea.vmem %s4, %s222
        %p224 = pneg %p129
        %p225 = pneg %p126
        %p226 = pneg %p155
        %p227 = pneg %p152
        %s228 = sand.u32 %s142, 1
        %s229 = scalar_lea.sflag [#allocation3], %s228
        %s230 = sand.u32 %s142, 1
        %s231 = smul.addr %s230, 64
        %s232 = scalar_lea.vmem [#allocation2], %s231
        %p233 = scmp.lt.s32.totalorder %s19, 1
        %s234 = scalar_select %p233, %s19, 1
        %s235 = smul.addr %s234, 8
        %s236 = smul.addr %s235, 8
        %s237 = scalar_lea.vmem %s0, %s236
        %p238 = scmp.lt.s32.totalorder %s19, 1
        %s239 = scalar_select %p238, %s19, 1
        %s240 = smul.addr %s239, 8
        %s241 = smul.addr %s240, 8
        %s242 = scalar_lea.vmem %s4, %s241
        %v243 = vld [vmem:[%s1] sm:$0x3]
        %v244 = vld [vmem:[%s2] sm:$0x1]
        %v245 = vld [vmem:[%s3] sm:$0x1]
        %v246 = vmul.f32 %v243, 0.0078125
        %v247 = vmul.f32 %v246, %v246
        %v249 = vrot.slane %v247, 7
        %v251 = vsub.f32 %v246, %v249
        %v252 = vadd.f32 %v251, 1e-05
        %v253 = vrsqrt.pop %v252
        %v256 = vunpack.c.l.s4 1966171168
        %v257 = vunpack.c.0.s8 %v256
        %v258 = vlaneseq
        %v259 = vshrl.u32 %v258, 7
        %v260 = vsub.s32 %v257, %v259
        %v261 = vrot.slane %v253, %v260
        %v262 = vcombine.high %v261, %v261
        %v264 = vunpack.c.l.s4 1966171168
        %v265 = vunpack.c.0.s8 %v264
        %v266 = vlaneseq
        %v267 = vshrl.u32 %v266, 7
        %v268 = vsub.s32 %v265, %v267
        %v269 = vrot.slane %v262, %v268
        %v271 = vmul.f32 %v244, %v269
        %v272 = vmul.f32 %v246, %v271
        %v273 = vsub.f32 %v245, %v272
        %v274 = vld [vmem:[%s237] sm:$0xff]
        %v275 = vld [vmem:[%s237 + $0x8] sm:$0xff]
        %v276 = vld [vmem:[%s237 + $0x10] sm:$0xff]
        %v277 = vld [vmem:[%s237 + $0x18] sm:$0xff]
        %v278 = vld [vmem:[%s237 + $0x20] sm:$0xff]
        %v279 = vld [vmem:[%s237 + $0x28] sm:$0xff]
        %v280 = vld [vmem:[%s237 + $0x30] sm:$0xff]
        %v281 = vld [vmem:[%s237 + $0x38] sm:$0xff]
        %v283 = vlaneseq
        %v284 = vshrl.u32 %v283, 7
        %v285 = vsub.s32 0, %v284
        %v286 = vrot.slane %v271, %v285
        %v288 = vmul.f32 %v274, %v286
        %v289 = vmul.f32 %v275, %v286
        %v290 = vmul.f32 %v276, %v286
        %v291 = vmul.f32 %v277, %v286
        %v292 = vmul.f32 %v278, %v286
        %v293 = vmul.f32 %v279, %v286
        %v294 = vmul.f32 %v280, %v286
        %v295 = vmul.f32 %v281, %v286
        %v297 = vlaneseq
        %v298 = vshrl.u32 %v297, 7
        %v299 = vsub.s32 0, %v298
        %v300 = vrot.slane %v273, %v299
        %v302 = vadd.f32 %v288, %v300
        %v303 = vadd.f32 %v289, %v300
        %v304 = vadd.f32 %v290, %v300
        %v305 = vadd.f32 %v291, %v300
        %v306 = vadd.f32 %v292, %v300
        %v307 = vadd.f32 %v293, %v300
        %v308 = vadd.f32 %v294, %v300
        %v309 = vadd.f32 %v295, %v300
        %v310 = vld [vmem:[%s242] sm:$0xff]
        %v311 = vld [vmem:[%s242 + $0x8] sm:$0xff]
        %v312 = vld [vmem:[%s242 + $0x10] sm:$0xff]
        %v313 = vld [vmem:[%s242 + $0x18] sm:$0xff]
        %v314 = vld [vmem:[%s242 + $0x20] sm:$0xff]
        %v315 = vld [vmem:[%s242 + $0x28] sm:$0xff]
        %v316 = vld [vmem:[%s242 + $0x30] sm:$0xff]
        %v317 = vld [vmem:[%s242 + $0x38] sm:$0xff]
        %v318 = vadd.f32 %v302, %v310
        %v319 = vadd.f32 %v303, %v311
        %v320 = vadd.f32 %v304, %v312
        %v321 = vadd.f32 %v305, %v313
        %v322 = vadd.f32 %v306, %v314
        %v323 = vadd.f32 %v307, %v315
        %v324 = vadd.f32 %v308, %v316
        %v325 = vadd.f32 %v309, %v317
        %v326 = vmax.f32 %v318, 0.0
        %v327 = vmax.f32 %v319, 0.0
        %v328 = vmax.f32 %v320, 0.0
        %v329 = vmax.f32 %v321, 0.0
        %v330 = vmax.f32 %v322, 0.0
        %v331 = vmax.f32 %v323, 0.0
        %v332 = vmax.f32 %v324, 0.0
        %v333 = vmax.f32 %v325, 0.0
        %334 = vst [vmem:[%s232] sm:$0xff] %v326
        %335 = vst [vmem:[%s232 + $0x8] sm:$0xff] %v327
        %336 = vst [vmem:[%s232 + $0x10] sm:$0xff] %v328
        %337 = vst [vmem:[%s232 + $0x18] sm:$0xff] %v329
        %338 = vst [vmem:[%s232 + $0x20] sm:$0xff] %v330
        %339 = vst [vmem:[%s232 + $0x28] sm:$0xff] %v331
        %340 = vst [vmem:[%s232 + $0x30] sm:$0xff] %v332
        %341 = vst [vmem:[%s232 + $0x38] sm:$0xff] %v333
        %s342 = sand.u32 %s142, 1
        %s343 = scalar_lea.sflag [#allocation3], %s342
        %s344 = sand.u32 %s142, 1
        %s345 = smul.addr %s344, 64
        %s346 = scalar_lea.vmem [#allocation2], %s345
        // Predicated region
        $region41: #{bottleneck_forward.7} parent=39 // pred_check
          %p347 = pneg %p152
        $region42: #{bottleneck_forward.7} parent=39 // pred_check_branch
          %349 = sbr.rel (%p347) target = $region44
        $region43: #{bottleneck_forward.7} parent=39 // pred_region
          %s351 = ssub.s32 1024, 1024
          %352 = vsyncadd %s343, %s351
          %s353 = smul.addr %s19, 8
          %s354 = smul.addr %s353, 128
          %s355 = scalar_lea.hbm %s5, %s354
          %s356 = sshll.u32 %s346, 4
          %s357 = int_to_ptr.vmem [resolvable:$true] %s356
          %362 = dma.vmem_to_hbm [thread:$0]  %s357, 1024, %s355, %s343, 128, 128, 8
        $region44: #{bottleneck_forward.7} parent=39 // pred_fallthru
          _
      $region40: #{bottleneck_forward.7} parent=5 // pred_fallthru
        _
      %p363 = scmp.le.s32.totalorder 2, %s14
      // Predicated region
      $region45: #{bottleneck_forward.7} parent=5 // pred_check
        %p364 = pneg %p363
      $region46: #{bottleneck_forward.7} parent=5 // pred_check_branch
        %366 = sbr.rel (%p364) target = $region48
      $region47: #{bottleneck_forward.7} parent=5 // pred_region
        %s367 = ssub.s32 %s14, 2
        // Predicated region
        $region49: #{bottleneck_forward.7} parent=47 // pred_check
          %p368 = pneg %p158
        $region50: #{bottleneck_forward.7} parent=47 // pred_check_branch
          %370 = sbr.rel (%p368) target = $region52
        $region51: #{bottleneck_forward.7} parent=47 // pred_region
          %s371 = sand.u32 %s143, 1
          %s372 = scalar_lea.sflag [#allocation3], %s371
          %s373 = sand.u32 %s143, 1
          %s374 = smul.addr %s373, 64
          %s375 = scalar_lea.vmem [#allocation2], %s374
          %376 = dma.done %s372, 1024
        $region52: #{bottleneck_forward.7} parent=47 // pred_fallthru
          _
      $region48: #{bottleneck_forward.7} parent=5 // pred_fallthru
        _
    $region6: #{bottleneck_forward.7} parent=1 // loop_footer
      %s18 = sadd.s32 1, %s14
    $region7: #{bottleneck_forward.7} parent=1 // loop_footer_branch
      %13 = sbr.rel target = $region3
    $region8: #{bottleneck_forward.7} parent=1 // loop_exit
      _
    %377 = vsyncpa [#allocation3], 1
    %s378 = scalar_lea.sflag [#allocation3], 1
    %379 = vsyncpa %s378, 1

// kernel: bottleneck_forward.4
$region0: #{bottleneck_forward.4}
  #allocation0 [shape = 'u32[]', space=smem, size = 0x4, offset = 0x4, fixed_abs, tag = 'smem constant byte address 0x4 - core index']
  #allocation1 [shape = 'u32[144,128]{1,0:T(1,128)}', space=vmem, size = 0x12000, scoped, tag = 'internal scratch']
  %s0 = inlined_call_operand.hbm [shape: f32[2,8,8,128], index: 0, kind: input, shape index: {}]
  %s1 = inlined_call_operand.vmem [shape: bf16[128,32], index: 1, kind: input, shape index: {}]
  %s2 = inlined_call_operand.vmem [shape: f32[2,8,8,32], index: 2, kind: output, shape index: {0}]
  %s3 = inlined_call_operand.vmem [shape: f32[2,32], index: 3, kind: output, shape index: {1}]
  %4 = xla_tuple %s2, %s3
  %s5 = sld [smem:[#allocation0]]
  $region57: #{bottleneck_forward.4} parent=0
    _
  %s7 = ssub.s32 1, %s5
  %s8 = scalar_select 0, %s7, %s5
  $region1: #{bottleneck_forward.4} parent=0
    #allocation2 [shape = 'u8[65536]{0}', space=vmem, size = 0x10000, scoped, tag = 'input window, operand 0']
    #allocation3 [shape = 's32[2]{0}', space=sflag, size = 0x8, scoped, tag = 'scoped memory for bottleneck_forward.4']
    %9 = vsyncpa [#allocation3], 0
    %s10 = scalar_lea.sflag [#allocation3], 1
    %11 = vsyncpa %s10, 0
    loop: start=0, step=1, limit=4
    $region2: #{bottleneck_forward.4} parent=1 // loop_pre_header
      _
    $region3: #{bottleneck_forward.4} parent=1 // loop_header
      %s13 = sphi 0, %s17
      %p14 = scmp.ge.s32.totalorder %s13, 4
      %s23 = sphi 0, %s25
      %s26 = sphi 0, %s23
      %s27 = sphi 0, %s26
      %s43 = sphi 0, %s27
      %s47 = sphi 0, %s47
      %s49 = sphi 0, %s47
      %s50 = sphi 0, %s49
      %s64 = sphi 0, %s50
      %s70 = sphi 0, %s72
      %s73 = sphi 0, %s70
      %s74 = sphi 0, %s73
      %s90 = sphi 0, %s74
      %s94 = sphi 0, %s94
      %s96 = sphi 0, %s94
      %s97 = sphi 0, %s96
      %s111 = sphi 0, %s97
    $region4: #{bottleneck_forward.4} parent=1 // loop_header_branch
      %16 = sbr.rel (%p14) target = $region8
    $region5: #{bottleneck_forward.4} parent=1 // loop_body
      %s18 = ssub.s32 %s13, 1
      %s19 = ssub.s32 %s13, 2
      %s20 = sadd.s32 %s13, 1
      %s21 = ssub.s32 %s13, %s20
      %p22 = scmp.eq.s32.totalorder %s21, 0
      %s24 = sadd.s32 %s23, 1
      %s25 = scalar_select %p22, %s23, %s24
      %p28 = pneg %p22
      %p29 = scmp.eq.s32.totalorder %s13, 1
      %p30 = por %p28, %p29
      %p31 = scmp.ne.s32.totalorder %s23, %s26
      %p32 = scmp.eq.s32.totalorder %s13, 0
      %p33 = por %p31, %p32
      %p34 = scmp.ne.s32.totalorder %s23, %s26
      %p35 = scmp.eq.s32.totalorder %s18, 1
      %p36 = por %p34, %p35
      %p37 = scmp.ne.s32.totalorder %s26, %s27
      %p38 = scmp.eq.s32.totalorder %s18, 0
      %p39 = por %p37, %p38
      %p40 = scmp.ne.s32.totalorder %s26, %s27
      %p41 = scmp.eq.s32.totalorder %s19, 1
      %p42 = por %p40, %p41
      %p44 = scmp.ne.s32.totalorder %s27, %s43
      %p45 = scmp.eq.s32.totalorder %s19, 0
      %p46 = por %p44, %p45
      %s48 = sadd.s32 %s47, 1
      %p51 = scmp.eq.s32.totalorder %s13, 1
      %p52 = scmp.ne.s32.totalorder %s47, %s49
      %p53 = scmp.eq.s32.totalorder %s13, 0
      %p54 = por %p52, %p53
      %p55 = scmp.ne.s32.totalorder %s47, %s49
      %p56 = scmp.eq.s32.totalorder %s18, 1
      %p57 = por %p55, %p56
      %p58 = scmp.ne.s32.totalorder %s49, %s50
      %p59 = scmp.eq.s32.totalorder %s18, 0
      %p60 = por %p58, %p59
      %p61 = scmp.ne.s32.totalorder %s49, %s50
      %p62 = scmp.eq.s32.totalorder %s19, 1
      %p63 = por %p61, %p62
      %p65 = scmp.ne.s32.totalorder %s50, %s64
      %p66 = scmp.eq.s32.totalorder %s19, 0
      %p67 = por %p65, %p66
      %s68 = ssub.s32 %s13, %s20
      %p69 = scmp.eq.s32.totalorder %s68, 0
      %s71 = sadd.s32 %s70, 1
      %s72 = scalar_select %p69, %s70, %s71
      %p75 = pneg %p69
      %p76 = scmp.eq.s32.totalorder %s13, 1
      %p77 = por %p75, %p76
      %p78 = scmp.ne.s32.totalorder %s70, %s73
      %p79 = scmp.eq.s32.totalorder %s13, 0
      %p80 = por %p78, %p79
      %p81 = scmp.ne.s32.totalorder %s70, %s73
      %p82 = scmp.eq.s32.totalorder %s18, 1
      %p83 = por %p81, %p82
      %p84 = scmp.ne.s32.totalorder %s73, %s74
      %p85 = scmp.eq.s32.totalorder %s18, 0
      %p86 = por %p84, %p85
      %p87 = scmp.ne.s32.totalorder %s73, %s74
      %p88 = scmp.eq.s32.totalorder %s19, 1
      %p89 = por %p87, %p88
      %p91 = scmp.ne.s32.totalorder %s74, %s90
      %p92 = scmp.eq.s32.totalorder %s19, 0
      %p93 = por %p91, %p92
      %s95 = sadd.s32 %s94, 1
      %p98 = scmp.eq.s32.totalorder %s13, 1
      %p99 = scmp.ne.s32.totalorder %s94, %s96
      %p100 = scmp.eq.s32.totalorder %s13, 0
      %p101 = por %p99, %p100
      %p102 = scmp.ne.s32.totalorder %s94, %s96
      %p103 = scmp.eq.s32.totalorder %s18, 1
      %p104 = por %p102, %p103
      %p105 = scmp.ne.s32.totalorder %s96, %s97
      %p106 = scmp.eq.s32.totalorder %s18, 0
      %p107 = por %p105, %p106
      %p108 = scmp.ne.s32.totalorder %s96, %s97
      %p109 = scmp.eq.s32.totalorder %s19, 1
      %p110 = por %p108, %p109
      %p112 = scmp.ne.s32.totalorder %s97, %s111
      %p113 = scmp.eq.s32.totalorder %s19, 0
      %p114 = por %p112, %p113
      %p115 = scmp.le.s32.totalorder 1, %s13
      %p116 = scmp.lt.s32.totalorder %s13, 3
      %p117 = pnand %p115, %p116
      %p118 = pneg %p117
      // Predicated region
      $region9: #{bottleneck_forward.4} parent=5 // pred_check
        _
      $region10: #{bottleneck_forward.4} parent=5 // pred_check_branch
        %120 = sbr.rel (%p117) target = $region12
      $region11: #{bottleneck_forward.4} parent=5 // pred_region
        %s121 = ssub.s32 %s13, 1
        // Predicated region
        $region13: #{bottleneck_forward.4} parent=11 // pred_check
          %p122 = pneg %p60
        $region14: #{bottleneck_forward.4} parent=11 // pred_check_branch
          %124 = sbr.rel (%p122) target = $region16
        $region15: #{bottleneck_forward.4} parent=11 // pred_region
          _
        $region16: #{bottleneck_forward.4} parent=11 // pred_fallthru
          _
      $region12: #{bottleneck_forward.4} parent=5 // pred_fallthru
        _
      %p125 = scmp.lt.s32.totalorder %s13, 2
      // Predicated region
      $region17: #{bottleneck_forward.4} parent=5 // pred_check
        %p126 = pneg %p125
      $region18: #{bottleneck_forward.4} parent=5 // pred_check_branch
        %128 = sbr.rel (%p126) target = $region20
      $region19: #{bottleneck_forward.4} parent=5 // pred_region
        // Predicated region
        $region21: #{bottleneck_forward.4} parent=19 // pred_check
          %p129 = pneg %p33
        $region22: #{bottleneck_forward.4} parent=19 // pred_check_branch
          %131 = sbr.rel (%p129) target = $region24
        $region23: #{bottleneck_forward.4} parent=19 // pred_region
          %s132 = sand.u32 %s23, 1
          %s133 = scalar_lea.sflag [#allocation3], %s132
          %s134 = sand.u32 %s23, 1
          %s135 = smul.addr %s134, 64
          %s136 = scalar_lea.vmem [#allocation2], %s135
          %s138 = ssub.s32 1024, 1024
          %139 = vsyncadd %s133, %s138
          %s140 = smul.addr %s13, 8
          %s141 = smul.addr %s140, 128
          %s142 = scalar_lea.hbm %s0, %s141
          %s143 = sshll.u32 %s136, 4
          %s144 = int_to_ptr.vmem [resolvable:$true] %s143
          %149 = dma.hbm_to_vmem [thread:$0]  %s142, 1024, %s144, %s133, 128, 128, 8
        $region24: #{bottleneck_forward.4} parent=19 // pred_fallthru
          _
      $region20: #{bottleneck_forward.4} parent=5 // pred_fallthru
        _
      %p150 = scmp.le.s32.totalorder 1, %s13
      %p151 = scmp.lt.s32.totalorder %s13, 3
      %p152 = pnand %p150, %p151
      %p153 = pneg %p152
      // Predicated region
      $region25: #{bottleneck_forward.4} parent=5 // pred_check
        _
      $region26: #{bottleneck_forward.4} parent=5 // pred_check_branch
        %155 = sbr.rel (%p152) target = $region28
      $region27: #{bottleneck_forward.4} parent=5 // pred_region
        %s156 = ssub.s32 %s13, 1
        %s157 = sand.u32 %s26, 1
        %s158 = scalar_lea.sflag [#allocation3], %s157
        %s159 = sand.u32 %s26, 1
        %s160 = smul.addr %s159, 64
        %s161 = scalar_lea.vmem [#allocation2], %s160
        // Predicated region
        $region29: #{bottleneck_forward.4} parent=27 // pred_check
          %p162 = pneg %p39
        $region30: #{bottleneck_forward.4} parent=27 // pred_check_branch
          %164 = sbr.rel (%p162) target = $region32
        $region31: #{bottleneck_forward.4} parent=27 // pred_region
          %165 = dma.done %s158, 1024
        $region32: #{bottleneck_forward.4} parent=27 // pred_fallthru
          _
        %s166 = sand.u32 %s26, 1
        %s167 = scalar_lea.sflag [#allocation3], %s166
        %s168 = sand.u32 %s26, 1
        %s169 = smul.addr %s168, 64
        %s170 = scalar_lea.vmem [#allocation2], %s169
        %p171 = pneg %p39
        %p172 = pneg %p36
        %p173 = pneg %p60
        %p174 = pneg %p57
        %p175 = pneg %p86
        %p176 = pneg %p83
        %p177 = scmp.lt.s32.totalorder %s18, 1
        %s178 = scalar_select %p177, %s18, 1
        %s179 = smul.addr %s178, 8
        %s180 = smul.addr %s179, 8
        %s181 = scalar_lea.vmem %s2, %s180
        %p182 = pneg %p107
        %p183 = pneg %p104
        %p184 = scmp.lt.s32.totalorder %s18, 1
        %s185 = scalar_select %p184, %s18, 1
        %s186 = smul.addr %s185, 8
        %s187 = smul.addr %s186, 8
        %s188 = scalar_lea.vmem %s2, %s187
        %p190 = scmp.eq.s32.totalorder %s18, 0
        // Predicated region
        $region33: #{bottleneck_forward.4} parent=27 // pred_check
          %p191 = pneg %p190
        $region34: #{bottleneck_forward.4} parent=27 // pred_check_branch
          %193 = sbr.rel (%p191) target = $region36
        $region35: #{bottleneck_forward.4} parent=27 // pred_region
          %vm194 = vcmask 254976
          %195 = vst.msk [vmem:[%s3] sm:$0x3] %vm194, 0.0
        $region36: #{bottleneck_forward.4} parent=27 // pred_fallthru
          _
        %v196 = vld [vmem:[%s161] sm:$0xff]
        %v197 = vld [vmem:[%s161 + $0x8] sm:$0xff]
        %v198 = vld [vmem:[%s161 + $0x10] sm:$0xff]
        %v199 = vld [vmem:[%s161 + $0x18] sm:$0xff]
        %v200 = vld [vmem:[%s161 + $0x20] sm:$0xff]
        %v201 = vld [vmem:[%s161 + $0x28] sm:$0xff]
        %v202 = vld [vmem:[%s161 + $0x30] sm:$0xff]
        %v203 = vld [vmem:[%s161 + $0x38] sm:$0xff]
        %v204 = vpack.c.bf16 %v197, %v196
        %v205 = vpack.c.bf16 %v199, %v198
        %v206 = vpack.c.bf16 %v201, %v200
        %v207 = vpack.c.bf16 %v203, %v202
        %v208 = vld [vmem:[%s1] sm:$0xf]
        %v209 = vld [vmem:[%s1 + $0x4] sm:$0xf]
        %v210 = vld [vmem:[%s1 + $0x8] sm:$0xf]
        %v211 = vld [vmem:[%s1 + $0xc] sm:$0xf]
        %v212 = vld [vmem:[%s1 + $0x10] sm:$0xf]
        %v213 = vld [vmem:[%s1 + $0x14] sm:$0xf]
        %v214 = vld [vmem:[%s1 + $0x18] sm:$0xf]
        %v215 = vld [vmem:[%s1 + $0x1c] sm:$0xf]
        %v216 = vld [vmem:[%s1 + $0x20] sm:$0xf]
        %v217 = vld [vmem:[%s1 + $0x24] sm:$0xf]
        %v218 = vld [vmem:[%s1 + $0x28] sm:$0xf]
        %v219 = vld [vmem:[%s1 + $0x2c] sm:$0xf]
        %v220 = vld [vmem:[%s1 + $0x30] sm:$0xf]
        %v221 = vld [vmem:[%s1 + $0x34] sm:$0xf]
        %v222 = vld [vmem:[%s1 + $0x38] sm:$0xf]
        %v223 = vld [vmem:[%s1 + $0x3c] sm:$0xf]
        %v240 = vunpack.c.l.b16 %v208
        %v241 = vunpack.c.l.b16 %v209
        %v242 = vunpack.c.l.b16 %v210
        %v243 = vunpack.c.l.b16 %v211
        %v244 = vunpack.c.l.b16 %v212
        %v245 = vunpack.c.l.b16 %v213
        %v246 = vunpack.c.l.b16 %v214
        %v247 = vunpack.c.l.b16 %v215
        %v248 = vunpack.c.l.b16 %v216
        %v249 = vunpack.c.l.b16 %v217
        %v250 = vunpack.c.l.b16 %v218
        %v251 = vunpack.c.l.b16 %v219
        %v252 = vunpack.c.l.b16 %v220
        %v253 = vunpack.c.l.b16 %v221
        %v254 = vunpack.c.l.b16 %v222
        %v255 = vunpack.c.l.b16 %v223
        %v256 = vpack.c.b16 %v241, %v240
        %v257 = vpack.c.b16 %v243, %v242
        %v258 = vpack.c.b16 %v245, %v244
        %v259 = vpack.c.b16 %v247, %v246
        %v260 = vpack.c.b16 %v249, %v248
        %v261 = vpack.c.b16 %v251, %v250
        %v262 = vpack.c.b16 %v253, %v252
        %v263 = vpack.c.b16 %v255, %v254
        %272 = vmatprep.subr.bf16.mxu0 0
        %273 = vmatpush1.bf16.msra.mxu0 %v263
        %274 = vmatprep.subr.bf16.mxu0 0
        %275 = vmatpush1.bf16.msra.mxu0 %v262
        %276 = vmatprep.subr.bf16.mxu0 0
        %277 = vmatpush1.bf16.msra.mxu0 %v261
        %278 = vmatprep.subr.bf16.mxu0 0
        %279 = vmatpush1.bf16.msra.mxu0 %v260
        %280 = vmatprep.subr.bf16.mxu0 0
        %281 = vmatpush1.bf16.msra.mxu0 %v259
        %282 = vmatprep.subr.bf16.mxu0 0
        %283 = vmatpush1.bf16.msra.mxu0 %v258
        %284 = vmatprep.subr.bf16.mxu0 0
        %285 = vmatpush1.bf16.msra.mxu0 %v257
        %286 = vmatprep.subr.bf16.mxu0 0
        %287 = vmatpush1.bf16.msra.mxu0 %v256
        %288 = vmatprep.subr.bf16.mxu0 0
        %289 = vmatpush2.bf16.msra.mxu0 0
        %290 = vmatprep.subr.bf16.mxu0 0
        %291 = vmatpush2.bf16.msra.mxu0 0
        %292 = vmatprep.subr.bf16.mxu0 0
        %293 = vmatpush2.bf16.msra.mxu0 0
        %294 = vmatprep.subr.bf16.mxu0 0
        %295 = vmatpush2.bf16.msra.mxu0 0
        %296 = vmatprep.subr.bf16.mxu0 0
        %297 = vmatpush2.bf16.msra.mxu0 0
        %298 = vmatprep.subr.bf16.mxu0 0
        %299 = vmatpush2.bf16.msra.mxu0 0
        %300 = vmatprep.subr.bf16.mxu0 0
        %301 = vmatpush2.bf16.msra.mxu0 0
        %302 = vmatprep.subr.bf16.mxu0 0
        %303 = vmatpush2.bf16.msra.mxu0 0
        %304 = vmatprep.mubr.bf16.mxu0 0
        %305 = vmatmul.mubr.bf16.gmra.mxu0 %v204
        %v306 = vpop.f32.mrf.mxu0
        %v307 = vadd.f32 0.0, %v306
        %v308 = vpop.f32.mrf.mxu0
        %v309 = vpop.f32.mrf.mxu0
        %v310 = vadd.f32 0.0, %v309
        %v311 = vpop.f32.mrf.mxu0
        %312 = vmatprep.mubr.bf16.mxu0 0
        %313 = vmatmul.mubr.bf16.gmra.mxu0 %v205
        %v314 = vpop.f32.mrf.mxu0
        %v315 = vadd.f32 0.0, %v314
        %v316 = vpop.f32.mrf.mxu0
        %v317 = vpop.f32.mrf.mxu0
        %v318 = vadd.f32 0.0, %v317
        %v319 = vpop.f32.mrf.mxu0
        %320 = vmatprep.mubr.bf16.mxu0 0
        %321 = vmatmul.mubr.bf16.gmra.mxu0 %v206
        %v322 = vpop.f32.mrf.mxu0
        %v323 = vadd.f32 0.0, %v322
        %v324 = vpop.f32.mrf.mxu0
        %v325 = vpop.f32.mrf.mxu0
        %v326 = vadd.f32 0.0, %v325
        %v327 = vpop.f32.mrf.mxu0
        %328 = vmatprep.mubr.bf16.mxu0 0
        %329 = vmatmul.mubr.bf16.gmra.mxu0 %v207
        %v330 = vpop.f32.mrf.mxu0
        %v331 = vadd.f32 0.0, %v330
        %v332 = vpop.f32.mrf.mxu0
        %v333 = vpop.f32.mrf.mxu0
        %v334 = vadd.f32 0.0, %v333
        %v335 = vpop.f32.mrf.mxu0
        %336 = vdwg.mxu0
        %vm337 = vcmask 261120
        %338 = vst.msk [vmem:[%s188] sm:$0xff] %vm337, %v307
        %339 = vst.msk [vmem:[%s188 + $0x8] sm:$0xff] %vm337, %v310
        %340 = vst.msk [vmem:[%s188 + $0x10] sm:$0xff] %vm337, %v315
        %341 = vst.msk [vmem:[%s188 + $0x18] sm:$0xff] %vm337, %v318
        %342 = vst.msk [vmem:[%s188 + $0x20] sm:$0xff] %vm337, %v323
        %343 = vst.msk [vmem:[%s188 + $0x28] sm:$0xff] %vm337, %v326
        %344 = vst.msk [vmem:[%s188 + $0x30] sm:$0xff] %vm337, %v331
        %345 = vst.msk [vmem:[%s188 + $0x38] sm:$0xff] %vm337, %v334
        %v346 = vld [vmem:[%s3] sm:$0x3]
        %v347 = vsel %vm337, %v307, 0.0
        %v348 = vsel %vm337, %v310, 0.0
        %v349 = vadd.f32 %v347, %v348
        %v350 = vsel %vm337, %v315, 0.0
        %v351 = vadd.f32 %v349, %v350
        %v352 = vsel %vm337, %v318, 0.0
        %v353 = vadd.f32 %v351, %v352
        %v354 = vsel %vm337, %v323, 0.0
        %v355 = vadd.f32 %v353, %v354
        %v356 = vsel %vm337, %v326, 0.0
        %v357 = vadd.f32 %v355, %v356
        %v358 = vsel %vm337, %v331, 0.0
        %v359 = vadd.f32 %v357, %v358
        %v360 = vsel %vm337, %v334, 0.0
        %v361 = vadd.f32 %v359, %v360
        %v362 = vrot.slane %v361, 4
        %v363 = vadd.f32 %v361, %v362
        %v364 = vrot.slane %v363, 2
        %v365 = vadd.f32 %v363, %v364
        %v366 = vrot.slane %v365, 1
        %v367 = vadd.f32 %v365, %v366
        %v368 = vmul.f32 %v307, %v307
        %v369 = vmul.f32 %v310, %v310
        %v370 = vmul.f32 %v315, %v315
        %v371 = vmul.f32 %v318, %v318
        %v372 = vmul.f32 %v323, %v323
        %v373 = vmul.f32 %v326, %v326
        %v374 = vmul.f32 %v331, %v331
        %v375 = vmul.f32 %v334, %v334
        %v376 = vsel %vm337, %v368, 0.0
        %v377 = vsel %vm337, %v369, 0.0
        %v378 = vadd.f32 %v376, %v377
        %v379 = vsel %vm337, %v370, 0.0
        %v380 = vadd.f32 %v378, %v379
        %v381 = vsel %vm337, %v371, 0.0
        %v382 = vadd.f32 %v380, %v381
        %v383 = vsel %vm337, %v372, 0.0
        %v384 = vadd.f32 %v382, %v383
        %v385 = vsel %vm337, %v373, 0.0
        %v386 = vadd.f32 %v384, %v385
        %v387 = vsel %vm337, %v374, 0.0
        %v388 = vadd.f32 %v386, %v387
        %v389 = vsel %vm337, %v375, 0.0
        %v390 = vadd.f32 %v388, %v389
        %v391 = vrot.slane %v390, 4
        %v392 = vadd.f32 %v390, %v391
        %v393 = vrot.slane %v392, 2
        %v394 = vadd.f32 %v392, %v393
        %v395 = vrot.slane %v394, 1
        %v396 = vadd.f32 %v394, %v395
        %vm397 = vcmask 1040384
        %v398 = vsel %vm397, %v367, %v396
        %v399 = vadd.f32 %v346, %v398
        %vm400 = vcmask 254976
        %401 = vst.msk [vmem:[%s3] sm:$0x3] %vm400, %v399
        %p402 = scmp.lt.s32.totalorder %s18, 1
        %s403 = scalar_select %p402, %s18, 1
        %s404 = smul.addr %s403, 8
        %s405 = smul.addr %s404, 8
        %s406 = scalar_lea.vmem %s2, %s405
        // Predicated region
        $region37: #{bottleneck_forward.4} parent=27 // pred_check
          %p407 = pneg %p83
        $region38: #{bottleneck_forward.4} parent=27 // pred_check_branch
          %409 = sbr.rel (%p407) target = $region40
        $region39: #{bottleneck_forward.4} parent=27 // pred_region
          _
        $region40: #{bottleneck_forward.4} parent=27 // pred_fallthru
          _
        // Predicated region
        $region41: #{bottleneck_forward.4} parent=27 // pred_check
          %p410 = pneg %p104
        $region42: #{bottleneck_forward.4} parent=27 // pred_check_branch
          %412 = sbr.rel (%p410) target = $region44
        $region43: #{bottleneck_forward.4} parent=27 // pred_region
          _
        $region44: #{bottleneck_forward.4} parent=27 // pred_fallthru
          _
        // Predicated region
        $region45: #{bottleneck_forward.4} parent=27 // pred_check
          %p413 = pneg %p104
        $region46: #{bottleneck_forward.4} parent=27 // pred_check_branch
          %415 = sbr.rel (%p413) target = $region48
        $region47: #{bottleneck_forward.4} parent=27 // pred_region
          _
        $region48: #{bottleneck_forward.4} parent=27 // pred_fallthru
          _
      $region28: #{bottleneck_forward.4} parent=5 // pred_fallthru
        _
      %p416 = scmp.le.s32.totalorder 2, %s13
      // Predicated region
      $region49: #{bottleneck_forward.4} parent=5 // pred_check
        %p417 = pneg %p416
      $region50: #{bottleneck_forward.4} parent=5 // pred_check_branch
        %419 = sbr.rel (%p417) target = $region52
      $region51: #{bottleneck_forward.4} parent=5 // pred_region
        %s420 = ssub.s32 %s13, 2
        // Predicated region
        $region53: #{bottleneck_forward.4} parent=51 // pred_check
          %p421 = pneg %p89
        $region54: #{bottleneck_forward.4} parent=51 // pred_check_branch
          %423 = sbr.rel (%p421) target = $region56
        $region55: #{bottleneck_forward.4} parent=51 // pred_region
          %p424 = scmp.lt.s32.totalorder %s19, 1
          %s425 = scalar_select %p424, %s19, 1
          %s426 = smul.addr %s425, 8
          %s427 = smul.addr %s426, 8
          %s428 = scalar_lea.vmem %s2, %s427
        $region56: #{bottleneck_forward.4} parent=51 // pred_fallthru
          _
      $region52: #{bottleneck_forward.4} parent=5 // pred_fallthru
        _
    $region6: #{bottleneck_forward.4} parent=1 // loop_footer
      %s17 = sadd.s32 1, %s13
    $region7: #{bottleneck_forward.4} parent=1 // loop_footer_branch
      %12 = sbr.rel target = $region3
    $region8: #{bottleneck_forward.4} parent=1 // loop_exit
      _
    %429 = vsyncpa [#allocation3], 1
    %s430 = scalar_lea.sflag [#allocation3], 1
    %431 = vsyncpa %s430, 1

// kernel: bottleneck_forward.6
$region0: #{bottleneck_forward.6}
  #allocation0 [shape = 'u32[]', space=smem, size = 0x4, offset = 0x4, fixed_abs, tag = 'smem constant byte address 0x4 - core index']
  #allocation1 [shape = 'u32[144,128]{1,0:T(1,128)}', space=vmem, size = 0x12000, scoped, tag = 'internal scratch']
  %s0 = inlined_call_operand.vmem [shape: f32[2,8,8,32], index: 0, kind: input, shape index: {}]
  %s1 = inlined_call_operand.vmem [shape: f32[2,32], index: 1, kind: input, shape index: {}]
  %s2 = inlined_call_operand.vmem [shape: f32[1,32], index: 2, kind: input, shape index: {}]
  %s3 = inlined_call_operand.vmem [shape: f32[1,32], index: 3, kind: input, shape index: {}]
  %s4 = inlined_call_operand.vmem [shape: bf16[32,128], index: 4, kind: input, shape index: {}]
  %s5 = inlined_call_operand.vmem [shape: f32[2,8,8,128], index: 5, kind: output, shape index: {0}]
  %s6 = inlined_call_operand.vmem [shape: f32[2,128], index: 6, kind: output, shape index: {1}]
  %7 = xla_tuple %s5, %s6
  %s8 = sld [smem:[#allocation0]]
  $region65: #{bottleneck_forward.6} parent=0
    _
  %s10 = ssub.s32 1, %s8
  %s11 = scalar_select 0, %s10, %s8
  loop: start=0, step=1, limit=4
  $region2: #{bottleneck_forward.6} parent=0 // loop_pre_header
    _
  $region3: #{bottleneck_forward.6} parent=0 // loop_header
    %s13 = sphi 0, %s17
    %p14 = scmp.ge.s32.totalorder %s13, 4
    %s23 = sphi 0, %s25
    %s26 = sphi 0, %s23
    %s27 = sphi 0, %s26
    %s43 = sphi 0, %s27
    %s47 = sphi 0, %s47
    %s49 = sphi 0, %s47
    %s50 = sphi 0, %s49
    %s64 = sphi 0, %s50
    %s68 = sphi 0, %s68
    %s70 = sphi 0, %s68
    %s71 = sphi 0, %s70
    %s85 = sphi 0, %s71
    %s89 = sphi 0, %s89
    %s91 = sphi 0, %s89
    %s92 = sphi 0, %s91
    %s106 = sphi 0, %s92
    %s110 = sphi 0, %s110
    %s112 = sphi 0, %s110
    %s113 = sphi 0, %s112
    %s127 = sphi 0, %s113
    %s133 = sphi 0, %s135
    %s136 = sphi 0, %s133
    %s137 = sphi 0, %s136
    %s153 = sphi 0, %s137
    %s157 = sphi 0, %s157
    %s159 = sphi 0, %s157
    %s160 = sphi 0, %s159
    %s174 = sphi 0, %s160
  $region4: #{bottleneck_forward.6} parent=0 // loop_header_branch
    %16 = sbr.rel (%p14) target = $region8
  $region5: #{bottleneck_forward.6} parent=0 // loop_body
    %s18 = ssub.s32 %s13, 1
    %s19 = ssub.s32 %s13, 2
    %s20 = sadd.s32 %s13, 1
    %s21 = ssub.s32 %s13, %s20
    %p22 = scmp.eq.s32.totalorder %s21, 0
    %s24 = sadd.s32 %s23, 1
    %s25 = scalar_select %p22, %s23, %s24
    %p28 = pneg %p22
    %p29 = scmp.eq.s32.totalorder %s13, 1
    %p30 = por %p28, %p29
    %p31 = scmp.ne.s32.totalorder %s23, %s26
    %p32 = scmp.eq.s32.totalorder %s13, 0
    %p33 = por %p31, %p32
    %p34 = scmp.ne.s32.totalorder %s23, %s26
    %p35 = scmp.eq.s32.totalorder %s18, 1
    %p36 = por %p34, %p35
    %p37 = scmp.ne.s32.totalorder %s26, %s27
    %p38 = scmp.eq.s32.totalorder %s18, 0
    %p39 = por %p37, %p38
    %p40 = scmp.ne.s32.totalorder %s26, %s27
    %p41 = scmp.eq.s32.totalorder %s19, 1
    %p42 = por %p40, %p41
    %p44 = scmp.ne.s32.totalorder %s27, %s43
    %p45 = scmp.eq.s32.totalorder %s19, 0
    %p46 = por %p44, %p45
    %s48 = sadd.s32 %s47, 1
    %p51 = scmp.eq.s32.totalorder %s13, 1
    %p52 = scmp.ne.s32.totalorder %s47, %s49
    %p53 = scmp.eq.s32.totalorder %s13, 0
    %p54 = por %p52, %p53
    %p55 = scmp.ne.s32.totalorder %s47, %s49
    %p56 = scmp.eq.s32.totalorder %s18, 1
    %p57 = por %p55, %p56
    %p58 = scmp.ne.s32.totalorder %s49, %s50
    %p59 = scmp.eq.s32.totalorder %s18, 0
    %p60 = por %p58, %p59
    %p61 = scmp.ne.s32.totalorder %s49, %s50
    %p62 = scmp.eq.s32.totalorder %s19, 1
    %p63 = por %p61, %p62
    %p65 = scmp.ne.s32.totalorder %s50, %s64
    %p66 = scmp.eq.s32.totalorder %s19, 0
    %p67 = por %p65, %p66
    %s69 = sadd.s32 %s68, 1
    %p72 = scmp.eq.s32.totalorder %s13, 1
    %p73 = scmp.ne.s32.totalorder %s68, %s70
    %p74 = scmp.eq.s32.totalorder %s13, 0
    %p75 = por %p73, %p74
    %p76 = scmp.ne.s32.totalorder %s68, %s70
    %p77 = scmp.eq.s32.totalorder %s18, 1
    %p78 = por %p76, %p77
    %p79 = scmp.ne.s32.totalorder %s70, %s71
    %p80 = scmp.eq.s32.totalorder %s18, 0
    %p81 = por %p79, %p80
    %p82 = scmp.ne.s32.totalorder %s70, %s71
    %p83 = scmp.eq.s32.totalorder %s19, 1
    %p84 = por %p82, %p83
    %p86 = scmp.ne.s32.totalorder %s71, %s85
    %p87 = scmp.eq.s32.totalorder %s19, 0
    %p88 = por %p86, %p87
    %s90 = sadd.s32 %s89, 1
    %p93 = scmp.eq.s32.totalorder %s13, 1
    %p94 = scmp.ne.s32.totalorder %s89, %s91
    %p95 = scmp.eq.s32.totalorder %s13, 0
    %p96 = por %p94, %p95
    %p97 = scmp.ne.s32.totalorder %s89, %s91
    %p98 = scmp.eq.s32.totalorder %s18, 1
    %p99 = por %p97, %p98
    %p100 = scmp.ne.s32.totalorder %s91, %s92
    %p101 = scmp.eq.s32.totalorder %s18, 0
    %p102 = por %p100, %p101
    %p103 = scmp.ne.s32.totalorder %s91, %s92
    %p104 = scmp.eq.s32.totalorder %s19, 1
    %p105 = por %p103, %p104
    %p107 = scmp.ne.s32.totalorder %s92, %s106
    %p108 = scmp.eq.s32.totalorder %s19, 0
    %p109 = por %p107, %p108
    %s111 = sadd.s32 %s110, 1
    %p114 = scmp.eq.s32.totalorder %s13, 1
    %p115 = scmp.ne.s32.totalorder %s110, %s112
    %p116 = scmp.eq.s32.totalorder %s13, 0
    %p117 = por %p115, %p116
    %p118 = scmp.ne.s32.totalorder %s110, %s112
    %p119 = scmp.eq.s32.totalorder %s18, 1
    %p120 = por %p118, %p119
    %p121 = scmp.ne.s32.totalorder %s112, %s113
    %p122 = scmp.eq.s32.totalorder %s18, 0
    %p123 = por %p121, %p122
    %p124 = scmp.ne.s32.totalorder %s112, %s113
    %p125 = scmp.eq.s32.totalorder %s19, 1
    %p126 = por %p124, %p125
    %p128 = scmp.ne.s32.totalorder %s113, %s127
    %p129 = scmp.eq.s32.totalorder %s19, 0
    %p130 = por %p128, %p129
    %s131 = ssub.s32 %s13, %s20
    %p132 = scmp.eq.s32.totalorder %s131, 0
    %s134 = sadd.s32 %s133, 1
    %s135 = scalar_select %p132, %s133, %s134
    %p138 = pneg %p132
    %p139 = scmp.eq.s32.totalorder %s13, 1
    %p140 = por %p138, %p139
    %p141 = scmp.ne.s32.totalorder %s133, %s136
    %p142 = scmp.eq.s32.totalorder %s13, 0
    %p143 = por %p141, %p142
    %p144 = scmp.ne.s32.totalorder %s133, %s136
    %p145 = scmp.eq.s32.totalorder %s18, 1
    %p146 = por %p144, %p145
    %p147 = scmp.ne.s32.totalorder %s136, %s137
    %p148 = scmp.eq.s32.totalorder %s18, 0
    %p149 = por %p147, %p148
    %p150 = scmp.ne.s32.totalorder %s136, %s137
    %p151 = scmp.eq.s32.totalorder %s19, 1
    %p152 = por %p150, %p151
    %p154 = scmp.ne.s32.totalorder %s137, %s153
    %p155 = scmp.eq.s32.totalorder %s19, 0
    %p156 = por %p154, %p155
    %s158 = sadd.s32 %s157, 1
    %p161 = scmp.eq.s32.totalorder %s13, 1
    %p162 = scmp.ne.s32.totalorder %s157, %s159
    %p163 = scmp.eq.s32.totalorder %s13, 0
    %p164 = por %p162, %p163
    %p165 = scmp.ne.s32.totalorder %s157, %s159
    %p166 = scmp.eq.s32.totalorder %s18, 1
    %p167 = por %p165, %p166
    %p168 = scmp.ne.s32.totalorder %s159, %s160
    %p169 = scmp.eq.s32.totalorder %s18, 0
    %p170 = por %p168, %p169
    %p171 = scmp.ne.s32.totalorder %s159, %s160
    %p172 = scmp.eq.s32.totalorder %s19, 1
    %p173 = por %p171, %p172
    %p175 = scmp.ne.s32.totalorder %s160, %s174
    %p176 = scmp.eq.s32.totalorder %s19, 0
    %p177 = por %p175, %p176
    %p178 = scmp.le.s32.totalorder 1, %s13
    %p179 = scmp.lt.s32.totalorder %s13, 3
    %p180 = pnand %p178, %p179
    %p181 = pneg %p180
    // Predicated region
    $region9: #{bottleneck_forward.6} parent=5 // pred_check
      _
    $region10: #{bottleneck_forward.6} parent=5 // pred_check_branch
      %183 = sbr.rel (%p180) target = $region12
    $region11: #{bottleneck_forward.6} parent=5 // pred_region
      %s184 = ssub.s32 %s13, 1
      // Predicated region
      $region13: #{bottleneck_forward.6} parent=11 // pred_check
        %p185 = pneg %p60
      $region14: #{bottleneck_forward.6} parent=11 // pred_check_branch
        %187 = sbr.rel (%p185) target = $region16
      $region15: #{bottleneck_forward.6} parent=11 // pred_region
        _
      $region16: #{bottleneck_forward.6} parent=11 // pred_fallthru
        _
      // Predicated region
      $region17: #{bottleneck_forward.6} parent=11 // pred_check
        %p188 = pneg %p81
      $region18: #{bottleneck_forward.6} parent=11 // pred_check_branch
        %190 = sbr.rel (%p188) target = $region20
      $region19: #{bottleneck_forward.6} parent=11 // pred_region
        _
      $region20: #{bottleneck_forward.6} parent=11 // pred_fallthru
        _
      // Predicated region
      $region21: #{bottleneck_forward.6} parent=11 // pred_check
        %p191 = pneg %p102
      $region22: #{bottleneck_forward.6} parent=11 // pred_check_branch
        %193 = sbr.rel (%p191) target = $region24
      $region23: #{bottleneck_forward.6} parent=11 // pred_region
        _
      $region24: #{bottleneck_forward.6} parent=11 // pred_fallthru
        _
      // Predicated region
      $region25: #{bottleneck_forward.6} parent=11 // pred_check
        %p194 = pneg %p123
      $region26: #{bottleneck_forward.6} parent=11 // pred_check_branch
        %196 = sbr.rel (%p194) target = $region28
      $region27: #{bottleneck_forward.6} parent=11 // pred_region
        _
      $region28: #{bottleneck_forward.6} parent=11 // pred_fallthru
        _
    $region12: #{bottleneck_forward.6} parent=5 // pred_fallthru
      _
    %p197 = scmp.lt.s32.totalorder %s13, 2
    // Predicated region
    $region29: #{bottleneck_forward.6} parent=5 // pred_check
      %p198 = pneg %p197
    $region30: #{bottleneck_forward.6} parent=5 // pred_check_branch
      %200 = sbr.rel (%p198) target = $region32
    $region31: #{bottleneck_forward.6} parent=5 // pred_region
      // Predicated region
      $region33: #{bottleneck_forward.6} parent=31 // pred_check
        %p201 = pneg %p33
      $region34: #{bottleneck_forward.6} parent=31 // pred_check_branch
        %203 = sbr.rel (%p201) target = $region36
      $region35: #{bottleneck_forward.6} parent=31 // pred_region
        %p204 = scmp.lt.s32.totalorder %s13, 1
        %s205 = scalar_select %p204, %s13, 1
        %s206 = smul.addr %s205, 8
        %s207 = smul.addr %s206, 8
        %s208 = scalar_lea.vmem %s0, %s207
      $region36: #{bottleneck_forward.6} parent=31 // pred_fallthru
        _
    $region32: #{bottleneck_forward.6} parent=5 // pred_fallthru
      _
    %p209 = scmp.le.s32.totalorder 1, %s13
    %p210 = scmp.lt.s32.totalorder %s13, 3
    %p211 = pnand %p209, %p210
    %p212 = pneg %p211
    // Predicated region
    $region37: #{bottleneck_forward.6} parent=5 // pred_check
      _
    $region38: #{bottleneck_forward.6} parent=5 // pred_check_branch
      %214 = sbr.rel (%p211) target = $region40
    $region39: #{bottleneck_forward.6} parent=5 // pred_region
      %s215 = ssub.s32 %s13, 1
      %p216 = scmp.lt.s32.totalorder %s18, 1
      %s217 = scalar_select %p216, %s18, 1
      %s218 = smul.addr %s217, 8
      %s219 = smul.addr %s218, 8
      %s220 = scalar_lea.vmem %s0, %s219
      %p221 = pneg %p39
      %p222 = pneg %p36
      %p223 = pneg %p60
      %p224 = pneg %p57
      %p225 = pneg %p81
      %p226 = pneg %p78
      %p227 = pneg %p102
      %p228 = pneg %p99
      %p229 = pneg %p123
      %p230 = pneg %p120
      %p231 = pneg %p149
      %p232 = pneg %p146
      %p233 = scmp.lt.s32.totalorder %s18, 1
      %s234 = scalar_select %p233, %s18, 1
      %s235 = smul.addr %s234, 8
      %s236 = smul.addr %s235, 8
      %s237 = scalar_lea.vmem %s5, %s236
      %p238 = pneg %p170
      %p239 = pneg %p167
      %p240 = scmp.lt.s32.totalorder %s18, 1
      %s241 = scalar_select %p240, %s18, 1
      %s242 = smul.addr %s241, 8
      %s243 = smul.addr %s242, 8
      %s244 = scalar_lea.vmem %s0, %s243
      %p245 = scmp.lt.s32.totalorder %s18, 1
      %s246 = scalar_select %p245, %s18, 1
      %s247 = smul.addr %s246, 8
      %s248 = smul.addr %s247, 8
      %s249 = scalar_lea.vmem %s5, %s248
      %p251 = scmp.eq.s32.totalorder %s18, 0
      // Predicated region
      $region41: #{bottleneck_forward.6} parent=39 // pred_check
        %p252 = pneg %p251
      $region42: #{bottleneck_forward.6} parent=39 // pred_check_branch
        %254 = sbr.rel (%p252) target = $region44
      $region43: #{bottleneck_forward.6} parent=39 // pred_region
        %255 = vst [vmem:[%s6] sm:$0x3] 0.0
      $region44: #{bottleneck_forward.6} parent=39 // pred_fallthru
        _
      %v256 = vld [vmem:[%s1] sm:$0x3]
      %v257 = vld [vmem:[%s2] sm:$0x1]
      %v258 = vld [vmem:[%s3] sm:$0x1]
      %v259 = vmul.f32 %v256, 0.0078125
      %v260 = vmul.f32 %v259, %v259
      %v262 = vrot.slane %v260, 7
      %v264 = vsub.f32 %v259, %v262
      %v265 = vadd.f32 %v264, 1e-05
      %v266 = vrsqrt.pop %v265
      %v269 = vunpack.c.l.s4 1966171168
      %v270 = vunpack.c.0.s8 %v269
      %v271 = vlaneseq
      %v272 = vshrl.u32 %v271, 7
      %v273 = vsub.s32 %v270, %v272
      %v274 = vrot.slane %v266, %v273
      %v275 = vcombine.high %v274, %v274
      %v277 = vunpack.c.l.s4 1966171168
      %v278 = vunpack.c.0.s8 %v277
      %v279 = vlaneseq
      %v280 = vshrl.u32 %v279, 7
      %v281 = vsub.s32 %v278, %v280
      %v282 = vrot.slane %v275, %v281
      %v284 = vmul.f32 %v257, %v282
      %v285 = vmul.f32 %v259, %v284
      %v286 = vsub.f32 %v258, %v285
      %v287 = vld [vmem:[%s244] sm:$0xff]
      %v288 = vld [vmem:[%s244 + $0x8] sm:$0xff]
      %v289 = vld [vmem:[%s244 + $0x10] sm:$0xff]
      %v290 = vld [vmem:[%s244 + $0x18] sm:$0xff]
      %v291 = vld [vmem:[%s244 + $0x20] sm:$0xff]
      %v292 = vld [vmem:[%s244 + $0x28] sm:$0xff]
      %v293 = vld [vmem:[%s244 + $0x30] sm:$0xff]
      %v294 = vld [vmem:[%s244 + $0x38] sm:$0xff]
      %v296 = vlaneseq
      %v297 = vshrl.u32 %v296, 7
      %v298 = vsub.s32 0, %v297
      %v299 = vrot.slane %v284, %v298
      %v301 = vmul.f32 %v287, %v299
      %v302 = vmul.f32 %v288, %v299
      %v303 = vmul.f32 %v289, %v299
      %v304 = vmul.f32 %v290, %v299
      %v305 = vmul.f32 %v291, %v299
      %v306 = vmul.f32 %v292, %v299
      %v307 = vmul.f32 %v293, %v299
      %v308 = vmul.f32 %v294, %v299
      %v310 = vlaneseq
      %v311 = vshrl.u32 %v310, 7
      %v312 = vsub.s32 0, %v311
      %v313 = vrot.slane %v286, %v312
      %v315 = vadd.f32 %v301, %v313
      %v316 = vadd.f32 %v302, %v313
      %v317 = vadd.f32 %v303, %v313
      %v318 = vadd.f32 %v304, %v313
      %v319 = vadd.f32 %v305, %v313
      %v320 = vadd.f32 %v306, %v313
      %v321 = vadd.f32 %v307, %v313
      %v322 = vadd.f32 %v308, %v313
      %v323 = vmax.f32 %v315, 0.0
      %v324 = vmax.f32 %v316, 0.0
      %v325 = vmax.f32 %v317, 0.0
      %v326 = vmax.f32 %v318, 0.0
      %v327 = vmax.f32 %v319, 0.0
      %v328 = vmax.f32 %v320, 0.0
      %v329 = vmax.f32 %v321, 0.0
      %v330 = vmax.f32 %v322, 0.0
      %v331 = vpack.c.bf16 %v324, %v323
      %v332 = vpack.c.bf16 %v326, %v325
      %v333 = vpack.c.bf16 %v328, %v327
      %v334 = vpack.c.bf16 %v330, %v329
      %v335 = vld [vmem:[%s4] sm:$0xf]
      %v336 = vld [vmem:[%s4 + $0x4] sm:$0xf]
      %v337 = vld [vmem:[%s4 + $0x8] sm:$0xf]
      %v338 = vld [vmem:[%s4 + $0xc] sm:$0xf]
      %v343 = vunpack.c.l.b16 %v335
      %v344 = vunpack.c.l.b16 %v336
      %v345 = vunpack.c.l.b16 %v337
      %v346 = vunpack.c.l.b16 %v338
      %v347 = vpack.c.b16 %v344, %v343
      %v348 = vpack.c.b16 %v346, %v345
      %vm351 = vcmask 261120
      %v353 = vsel %vm351, %v331, 0
      %v356 = vsel %vm351, %v332, 0
      %v359 = vsel %vm351, %v333, 0
      %v362 = vsel %vm351, %v334, 0
      %364 = vmatprep.subr.bf16.mxu0 0
      %365 = vmatpush1.bf16.msra.mxu0 0
      %366 = vmatprep.subr.bf16.mxu0 0
      %367 = vmatpush1.bf16.msra.mxu0 0
      %368 = vmatprep.subr.bf16.mxu0 0
      %369 = vmatpush1.bf16.msra.mxu0 0
      %370 = vmatprep.subr.bf16.mxu0 0
      %371 = vmatpush1.bf16.msra.mxu0 0
      %372 = vmatprep.subr.bf16.mxu0 0
      %373 = vmatpush1.bf16.msra.mxu0 0
      %374 = vmatprep.subr.bf16.mxu0 0
      %375 = vmatpush1.bf16.msra.mxu0 0
      %376 = vmatprep.subr.bf16.mxu0 0
      %377 = vmatpush1.bf16.msra.mxu0 %v348
      %378 = vmatprep.subr.bf16.mxu0 0
      %379 = vmatpush1.bf16.msra.mxu0 %v347
      %380 = vmatprep.subr.bf16.mxu0 0
      %381 = vmatpush2.bf16.msra.mxu0 0
      %382 = vmatprep.subr.bf16.mxu0 0
      %383 = vmatpush2.bf16.msra.mxu0 0
      %384 = vmatprep.subr.bf16.mxu0 0
      %385 = vmatpush2.bf16.msra.mxu0 0
      %386 = vmatprep.subr.bf16.mxu0 0
      %387 = vmatpush2.bf16.msra.mxu0 0
      %388 = vmatprep.subr.bf16.mxu0 0
      %389 = vmatpush2.bf16.msra.mxu0 0
      %390 = vmatprep.subr.bf16.mxu0 0
      %391 = vmatpush2.bf16.msra.mxu0 0
      %392 = vmatprep.subr.bf16.mxu0 0
      %393 = vmatpush2.bf16.msra.mxu0 0
      %394 = vmatprep.subr.bf16.mxu0 0
      %395 = vmatpush2.bf16.msra.mxu0 0
      %396 = vmatprep.mubr.bf16.mxu0 0
      %397 = vmatmul.mubr.bf16.gmra.mxu0 %v353
      %v398 = vpop.f32.mrf.mxu0
      %v399 = vadd.f32 0.0, %v398
      %v400 = vpop.f32.mrf.mxu0
      %v401 = vpop.f32.mrf.mxu0
      %v402 = vadd.f32 0.0, %v401
      %v403 = vpop.f32.mrf.mxu0
      %404 = vmatprep.mubr.bf16.mxu0 0
      %405 = vmatmul.mubr.bf16.gmra.mxu0 %v356
      %v406 = vpop.f32.mrf.mxu0
      %v407 = vadd.f32 0.0, %v406
      %v408 = vpop.f32.mrf.mxu0
      %v409 = vpop.f32.mrf.mxu0
      %v410 = vadd.f32 0.0, %v409
      %v411 = vpop.f32.mrf.mxu0
      %412 = vmatprep.mubr.bf16.mxu0 0
      %413 = vmatmul.mubr.bf16.gmra.mxu0 %v359
      %v414 = vpop.f32.mrf.mxu0
      %v415 = vadd.f32 0.0, %v414
      %v416 = vpop.f32.mrf.mxu0
      %v417 = vpop.f32.mrf.mxu0
      %v418 = vadd.f32 0.0, %v417
      %v419 = vpop.f32.mrf.mxu0
      %420 = vmatprep.mubr.bf16.mxu0 0
      %421 = vmatmul.mubr.bf16.gmra.mxu0 %v362
      %v422 = vpop.f32.mrf.mxu0
      %v423 = vadd.f32 0.0, %v422
      %v424 = vpop.f32.mrf.mxu0
      %v425 = vpop.f32.mrf.mxu0
      %v426 = vadd.f32 0.0, %v425
      %v427 = vpop.f32.mrf.mxu0
      %428 = vdwg.mxu0
      %429 = vst [vmem:[%s249] sm:$0xff] %v399
      %430 = vst [vmem:[%s249 + $0x8] sm:$0xff] %v402
      %431 = vst [vmem:[%s249 + $0x10] sm:$0xff] %v407
      %432 = vst [vmem:[%s249 + $0x18] sm:$0xff] %v410
      %433 = vst [vmem:[%s249 + $0x20] sm:$0xff] %v415
      %434 = vst [vmem:[%s249 + $0x28] sm:$0xff] %v418
      %435 = vst [vmem:[%s249 + $0x30] sm:$0xff] %v423
      %436 = vst [vmem:[%s249 + $0x38] sm:$0xff] %v426
      %v437 = vld [vmem:[%s6] sm:$0x3]
      %v438 = vadd.f32 %v399, %v402
      %v439 = vadd.f32 %v438, %v407
      %v440 = vadd.f32 %v439, %v410
      %v441 = vadd.f32 %v440, %v415
      %v442 = vadd.f32 %v441, %v418
      %v443 = vadd.f32 %v442, %v423
      %v444 = vadd.f32 %v443, %v426
      %v445 = vrot.slane %v444, 4
      %v446 = vadd.f32 %v444, %v445
      %v447 = vrot.slane %v446, 2
      %v448 = vadd.f32 %v446, %v447
      %v449 = vrot.slane %v448, 1
      %v450 = vadd.f32 %v448, %v449
      %v451 = vmul.f32 %v399, %v399
      %v452 = vmul.f32 %v402, %v402
      %v453 = vmul.f32 %v407, %v407
      %v454 = vmul.f32 %v410, %v410
      %v455 = vmul.f32 %v415, %v415
      %v456 = vmul.f32 %v418, %v418
      %v457 = vmul.f32 %v423, %v423
      %v458 = vmul.f32 %v426, %v426
      %v459 = vadd.f32 %v451, %v452
      %v460 = vadd.f32 %v459, %v453
      %v461 = vadd.f32 %v460, %v454
      %v462 = vadd.f32 %v461, %v455
      %v463 = vadd.f32 %v462, %v456
      %v464 = vadd.f32 %v463, %v457
      %v465 = vadd.f32 %v464, %v458
      %v466 = vrot.slane %v465, 4
      %v467 = vadd.f32 %v465, %v466
      %v468 = vrot.slane %v467, 2
      %v469 = vadd.f32 %v467, %v468
      %v470 = vrot.slane %v469, 1
      %v471 = vadd.f32 %v469, %v470
      %vm472 = vcmask 1040384
      %v473 = vsel %vm472, %v450, %v471
      %v474 = vadd.f32 %v437, %v473
      %475 = vst [vmem:[%s6] sm:$0x3] %v474
      %p476 = scmp.lt.s32.totalorder %s18, 1
      %s477 = scalar_select %p476, %s18, 1
      %s478 = smul.addr %s477, 8
      %s479 = smul.addr %s478, 8
      %s480 = scalar_lea.vmem %s5, %s479
      // Predicated region
      $region45: #{bottleneck_forward.6} parent=39 // pred_check
        %p481 = pneg %p146
      $region46: #{bottleneck_forward.6} parent=39 // pred_check_branch
        %483 = sbr.rel (%p481) target = $region48
      $region47: #{bottleneck_forward.6} parent=39 // pred_region
        _
      $region48: #{bottleneck_forward.6} parent=39 // pred_fallthru
        _
      // Predicated region
      $region49: #{bottleneck_forward.6} parent=39 // pred_check
        %p484 = pneg %p167
      $region50: #{bottleneck_forward.6} parent=39 // pred_check_branch
        %486 = sbr.rel (%p484) target = $region52
      $region51: #{bottleneck_forward.6} parent=39 // pred_region
        _
      $region52: #{bottleneck_forward.6} parent=39 // pred_fallthru
        _
      // Predicated region
      $region53: #{bottleneck_forward.6} parent=39 // pred_check
        %p487 = pneg %p167
      $region54: #{bottleneck_forward.6} parent=39 // pred_check_branch
        %489 = sbr.rel (%p487) target = $region56
      $region55: #{bottleneck_forward.6} parent=39 // pred_region
        _
      $region56: #{bottleneck_forward.6} parent=39 // pred_fallthru
        _
    $region40: #{bottleneck_forward.6} parent=5 // pred_fallthru
      _
    %p490 = scmp.le.s32.totalorder 2, %s13
    // Predicated region
    $region57: #{bottleneck_forward.6} parent=5 // pred_check
      %p491 = pneg %p490
    $region58: #{bottleneck_forward.6} parent=5 // pred_check_branch
      %493 = sbr.rel (%p491) target = $region60
    $region59: #{bottleneck_forward.6} parent=5 // pred_region
      %s494 = ssub.s32 %s13, 2
      // Predicated region
      $region61: #{bottleneck_forward.6} parent=59 // pred_check
        %p495 = pneg %p152
      $region62: #{bottleneck_forward.6} parent=59 // pred_check_branch
        %497 = sbr.rel (%p495) target = $region64
      $region63: #{bottleneck_forward.6} parent=59 // pred_region
        %p498 = scmp.lt.s32.totalorder %s19, 1
        %s499 = scalar_select %p498, %s19, 1
        %s500 = smul.addr %s499, 8
        %s501 = smul.addr %s500, 8
        %s502 = scalar_lea.vmem %s5, %s501
      $region64: #{bottleneck_forward.6} parent=59 // pred_fallthru
        _
    $region60: #{bottleneck_forward.6} parent=5 // pred_fallthru
      _
  $region6: #{bottleneck_forward.6} parent=0 // loop_footer
    %s17 = sadd.s32 1, %s13
  $region7: #{bottleneck_forward.6} parent=0 // loop_footer_branch
    %12 = sbr.rel target = $region3
  $region8: #{bottleneck_forward.6} parent=0 // loop_exit
    _

// kernel: bottleneck_forward.5
$region0: #{bottleneck_forward.5}
  #allocation0 [shape = 'u32[]', space=smem, size = 0x4, offset = 0x4, fixed_abs, tag = 'smem constant byte address 0x4 - core index']
  #allocation1 [shape = 'u32[144,128]{1,0:T(1,128)}', space=vmem, size = 0x12000, scoped, tag = 'internal scratch']
  #allocation2 [shape = 'f32[1,10,10,32]{3,2,1,0:T(8,128)}', space=vmem, size = 0x14000, scoped, tag = 'scratch operand']
  %s0 = inlined_call_operand.vmem [shape: f32[2,8,8,32], index: 0, kind: input, shape index: {}]
  %s1 = inlined_call_operand.vmem [shape: f32[2,32], index: 1, kind: input, shape index: {}]
  %s2 = inlined_call_operand.vmem [shape: f32[1,32], index: 2, kind: input, shape index: {}]
  %s3 = inlined_call_operand.vmem [shape: f32[1,32], index: 3, kind: input, shape index: {}]
  %s4 = inlined_call_operand.vmem [shape: bf16[288,32], index: 4, kind: input, shape index: {}]
  %s5 = inlined_call_operand.vmem [shape: f32[2,8,8,32], index: 5, kind: output, shape index: {0}]
  %s6 = inlined_call_operand.vmem [shape: f32[2,32], index: 6, kind: output, shape index: {1}]
  %7 = xla_tuple %s5, %s6
  %s8 = sld [smem:[#allocation0]]
  $region65: #{bottleneck_forward.5} parent=0
    _
  %s10 = ssub.s32 1, %s8
  %s11 = scalar_select 0, %s10, %s8
  loop: start=0, step=1, limit=4
  $region2: #{bottleneck_forward.5} parent=0 // loop_pre_header
    _
  $region3: #{bottleneck_forward.5} parent=0 // loop_header
    %s13 = sphi 0, %s17
    %p14 = scmp.ge.s32.totalorder %s13, 4
    %s23 = sphi 0, %s25
    %s26 = sphi 0, %s23
    %s27 = sphi 0, %s26
    %s43 = sphi 0, %s27
    %s47 = sphi 0, %s47
    %s49 = sphi 0, %s47
    %s50 = sphi 0, %s49
    %s64 = sphi 0, %s50
    %s68 = sphi 0, %s68
    %s70 = sphi 0, %s68
    %s71 = sphi 0, %s70
    %s85 = sphi 0, %s71
    %s89 = sphi 0, %s89
    %s91 = sphi 0, %s89
    %s92 = sphi 0, %s91
    %s106 = sphi 0, %s92
    %s110 = sphi 0, %s110
    %s112 = sphi 0, %s110
    %s113 = sphi 0, %s112
    %s127 = sphi 0, %s113
    %s133 = sphi 0, %s135
    %s136 = sphi 0, %s133
    %s137 = sphi 0, %s136
    %s153 = sphi 0, %s137
    %s157 = sphi 0, %s157
    %s159 = sphi 0, %s157
    %s160 = sphi 0, %s159
    %s174 = sphi 0, %s160
  $region4: #{bottleneck_forward.5} parent=0 // loop_header_branch
    %16 = sbr.rel (%p14) target = $region8
  $region5: #{bottleneck_forward.5} parent=0 // loop_body
    %s18 = ssub.s32 %s13, 1
    %s19 = ssub.s32 %s13, 2
    %s20 = sadd.s32 %s13, 1
    %s21 = ssub.s32 %s13, %s20
    %p22 = scmp.eq.s32.totalorder %s21, 0
    %s24 = sadd.s32 %s23, 1
    %s25 = scalar_select %p22, %s23, %s24
    %p28 = pneg %p22
    %p29 = scmp.eq.s32.totalorder %s13, 1
    %p30 = por %p28, %p29
    %p31 = scmp.ne.s32.totalorder %s23, %s26
    %p32 = scmp.eq.s32.totalorder %s13, 0
    %p33 = por %p31, %p32
    %p34 = scmp.ne.s32.totalorder %s23, %s26
    %p35 = scmp.eq.s32.totalorder %s18, 1
    %p36 = por %p34, %p35
    %p37 = scmp.ne.s32.totalorder %s26, %s27
    %p38 = scmp.eq.s32.totalorder %s18, 0
    %p39 = por %p37, %p38
    %p40 = scmp.ne.s32.totalorder %s26, %s27
    %p41 = scmp.eq.s32.totalorder %s19, 1
    %p42 = por %p40, %p41
    %p44 = scmp.ne.s32.totalorder %s27, %s43
    %p45 = scmp.eq.s32.totalorder %s19, 0
    %p46 = por %p44, %p45
    %s48 = sadd.s32 %s47, 1
    %p51 = scmp.eq.s32.totalorder %s13, 1
    %p52 = scmp.ne.s32.totalorder %s47, %s49
    %p53 = scmp.eq.s32.totalorder %s13, 0
    %p54 = por %p52, %p53
    %p55 = scmp.ne.s32.totalorder %s47, %s49
    %p56 = scmp.eq.s32.totalorder %s18, 1
    %p57 = por %p55, %p56
    %p58 = scmp.ne.s32.totalorder %s49, %s50
    %p59 = scmp.eq.s32.totalorder %s18, 0
    %p60 = por %p58, %p59
    %p61 = scmp.ne.s32.totalorder %s49, %s50
    %p62 = scmp.eq.s32.totalorder %s19, 1
    %p63 = por %p61, %p62
    %p65 = scmp.ne.s32.totalorder %s50, %s64
    %p66 = scmp.eq.s32.totalorder %s19, 0
    %p67 = por %p65, %p66
    %s69 = sadd.s32 %s68, 1
    %p72 = scmp.eq.s32.totalorder %s13, 1
    %p73 = scmp.ne.s32.totalorder %s68, %s70
    %p74 = scmp.eq.s32.totalorder %s13, 0
    %p75 = por %p73, %p74
    %p76 = scmp.ne.s32.totalorder %s68, %s70
    %p77 = scmp.eq.s32.totalorder %s18, 1
    %p78 = por %p76, %p77
    %p79 = scmp.ne.s32.totalorder %s70, %s71
    %p80 = scmp.eq.s32.totalorder %s18, 0
    %p81 = por %p79, %p80
    %p82 = scmp.ne.s32.totalorder %s70, %s71
    %p83 = scmp.eq.s32.totalorder %s19, 1
    %p84 = por %p82, %p83
    %p86 = scmp.ne.s32.totalorder %s71, %s85
    %p87 = scmp.eq.s32.totalorder %s19, 0
    %p88 = por %p86, %p87
    %s90 = sadd.s32 %s89, 1
    %p93 = scmp.eq.s32.totalorder %s13, 1
    %p94 = scmp.ne.s32.totalorder %s89, %s91
    %p95 = scmp.eq.s32.totalorder %s13, 0
    %p96 = por %p94, %p95
    %p97 = scmp.ne.s32.totalorder %s89, %s91
    %p98 = scmp.eq.s32.totalorder %s18, 1
    %p99 = por %p97, %p98
    %p100 = scmp.ne.s32.totalorder %s91, %s92
    %p101 = scmp.eq.s32.totalorder %s18, 0
    %p102 = por %p100, %p101
    %p103 = scmp.ne.s32.totalorder %s91, %s92
    %p104 = scmp.eq.s32.totalorder %s19, 1
    %p105 = por %p103, %p104
    %p107 = scmp.ne.s32.totalorder %s92, %s106
    %p108 = scmp.eq.s32.totalorder %s19, 0
    %p109 = por %p107, %p108
    %s111 = sadd.s32 %s110, 1
    %p114 = scmp.eq.s32.totalorder %s13, 1
    %p115 = scmp.ne.s32.totalorder %s110, %s112
    %p116 = scmp.eq.s32.totalorder %s13, 0
    %p117 = por %p115, %p116
    %p118 = scmp.ne.s32.totalorder %s110, %s112
    %p119 = scmp.eq.s32.totalorder %s18, 1
    %p120 = por %p118, %p119
    %p121 = scmp.ne.s32.totalorder %s112, %s113
    %p122 = scmp.eq.s32.totalorder %s18, 0
    %p123 = por %p121, %p122
    %p124 = scmp.ne.s32.totalorder %s112, %s113
    %p125 = scmp.eq.s32.totalorder %s19, 1
    %p126 = por %p124, %p125
    %p128 = scmp.ne.s32.totalorder %s113, %s127
    %p129 = scmp.eq.s32.totalorder %s19, 0
    %p130 = por %p128, %p129
    %s131 = ssub.s32 %s13, %s20
    %p132 = scmp.eq.s32.totalorder %s131, 0
    %s134 = sadd.s32 %s133, 1
    %s135 = scalar_select %p132, %s133, %s134
    %p138 = pneg %p132
    %p139 = scmp.eq.s32.totalorder %s13, 1
    %p140 = por %p138, %p139
    %p141 = scmp.ne.s32.totalorder %s133, %s136
    %p142 = scmp.eq.s32.totalorder %s13, 0
    %p143 = por %p141, %p142
    %p144 = scmp.ne.s32.totalorder %s133, %s136
    %p145 = scmp.eq.s32.totalorder %s18, 1
    %p146 = por %p144, %p145
    %p147 = scmp.ne.s32.totalorder %s136, %s137
    %p148 = scmp.eq.s32.totalorder %s18, 0
    %p149 = por %p147, %p148
    %p150 = scmp.ne.s32.totalorder %s136, %s137
    %p151 = scmp.eq.s32.totalorder %s19, 1
    %p152 = por %p150, %p151
    %p154 = scmp.ne.s32.totalorder %s137, %s153
    %p155 = scmp.eq.s32.totalorder %s19, 0
    %p156 = por %p154, %p155
    %s158 = sadd.s32 %s157, 1
    %p161 = scmp.eq.s32.totalorder %s13, 1
    %p162 = scmp.ne.s32.totalorder %s157, %s159
    %p163 = scmp.eq.s32.totalorder %s13, 0
    %p164 = por %p162, %p163
    %p165 = scmp.ne.s32.totalorder %s157, %s159
    %p166 = scmp.eq.s32.totalorder %s18, 1
    %p167 = por %p165, %p166
    %p168 = scmp.ne.s32.totalorder %s159, %s160
    %p169 = scmp.eq.s32.totalorder %s18, 0
    %p170 = por %p168, %p169
    %p171 = scmp.ne.s32.totalorder %s159, %s160
    %p172 = scmp.eq.s32.totalorder %s19, 1
    %p173 = por %p171, %p172
    %p175 = scmp.ne.s32.totalorder %s160, %s174
    %p176 = scmp.eq.s32.totalorder %s19, 0
    %p177 = por %p175, %p176
    %p178 = scmp.le.s32.totalorder 1, %s13
    %p179 = scmp.lt.s32.totalorder %s13, 3
    %p180 = pnand %p178, %p179
    %p181 = pneg %p180
    // Predicated region
    $region9: #{bottleneck_forward.5} parent=5 // pred_check
      _
    $region10: #{bottleneck_forward.5} parent=5 // pred_check_branch
      %183 = sbr.rel (%p180) target = $region12
    $region11: #{bottleneck_forward.5} parent=5 // pred_region
      %s184 = ssub.s32 %s13, 1
      // Predicated region
      $region13: #{bottleneck_forward.5} parent=11 // pred_check
        %p185 = pneg %p60
      $region14: #{bottleneck_forward.5} parent=11 // pred_check_branch
        %187 = sbr.rel (%p185) target = $region16
      $region15: #{bottleneck_forward.5} parent=11 // pred_region
        _
      $region16: #{bottleneck_forward.5} parent=11 // pred_fallthru
        _
      // Predicated region
      $region17: #{bottleneck_forward.5} parent=11 // pred_check
        %p188 = pneg %p81
      $region18: #{bottleneck_forward.5} parent=11 // pred_check_branch
        %190 = sbr.rel (%p188) target = $region20
      $region19: #{bottleneck_forward.5} parent=11 // pred_region
        _
      $region20: #{bottleneck_forward.5} parent=11 // pred_fallthru
        _
      // Predicated region
      $region21: #{bottleneck_forward.5} parent=11 // pred_check
        %p191 = pneg %p102
      $region22: #{bottleneck_forward.5} parent=11 // pred_check_branch
        %193 = sbr.rel (%p191) target = $region24
      $region23: #{bottleneck_forward.5} parent=11 // pred_region
        _
      $region24: #{bottleneck_forward.5} parent=11 // pred_fallthru
        _
      // Predicated region
      $region25: #{bottleneck_forward.5} parent=11 // pred_check
        %p194 = pneg %p123
      $region26: #{bottleneck_forward.5} parent=11 // pred_check_branch
        %196 = sbr.rel (%p194) target = $region28
      $region27: #{bottleneck_forward.5} parent=11 // pred_region
        _
      $region28: #{bottleneck_forward.5} parent=11 // pred_fallthru
        _
    $region12: #{bottleneck_forward.5} parent=5 // pred_fallthru
      _
    %p197 = scmp.lt.s32.totalorder %s13, 2
    // Predicated region
    $region29: #{bottleneck_forward.5} parent=5 // pred_check
      %p198 = pneg %p197
    $region30: #{bottleneck_forward.5} parent=5 // pred_check_branch
      %200 = sbr.rel (%p198) target = $region32
    $region31: #{bottleneck_forward.5} parent=5 // pred_region
      // Predicated region
      $region33: #{bottleneck_forward.5} parent=31 // pred_check
        %p201 = pneg %p33
      $region34: #{bottleneck_forward.5} parent=31 // pred_check_branch
        %203 = sbr.rel (%p201) target = $region36
      $region35: #{bottleneck_forward.5} parent=31 // pred_region
        %p204 = scmp.lt.s32.totalorder %s13, 1
        %s205 = scalar_select %p204, %s13, 1
        %s206 = smul.addr %s205, 8
        %s207 = smul.addr %s206, 8
        %s208 = scalar_lea.vmem %s0, %s207
      $region36: #{bottleneck_forward.5} parent=31 // pred_fallthru
        _
    $region32: #{bottleneck_forward.5} parent=5 // pred_fallthru
      _
    %p209 = scmp.le.s32.totalorder 1, %s13
    %p210 = scmp.lt.s32.totalorder %s13, 3
    %p211 = pnand %p209, %p210
    %p212 = pneg %p211
    // Predicated region
    $region37: #{bottleneck_forward.5} parent=5 // pred_check
      _
    $region38: #{bottleneck_forward.5} parent=5 // pred_check_branch
      %214 = sbr.rel (%p211) target = $region40
    $region39: #{bottleneck_forward.5} parent=5 // pred_region
      %s215 = ssub.s32 %s13, 1
      %p216 = scmp.lt.s32.totalorder %s18, 1
      %s217 = scalar_select %p216, %s18, 1
      %s218 = smul.addr %s217, 8
      %s219 = smul.addr %s218, 8
      %s220 = scalar_lea.vmem %s0, %s219
      %p221 = pneg %p39
      %p222 = pneg %p36
      %p223 = pneg %p60
      %p224 = pneg %p57
      %p225 = pneg %p81
      %p226 = pneg %p78
      %p227 = pneg %p102
      %p228 = pneg %p99
      %p229 = pneg %p123
      %p230 = pneg %p120
      %p231 = pneg %p149
      %p232 = pneg %p146
      %p233 = scmp.lt.s32.totalorder %s18, 1
      %s234 = scalar_select %p233, %s18, 1
      %s235 = smul.addr %s234, 8
      %s236 = smul.addr %s235, 8
      %s237 = scalar_lea.vmem %s5, %s236
      %p238 = pneg %p170
      %p239 = pneg %p167
      %p240 = scmp.lt.s32.totalorder %s18, 1
      %s241 = scalar_select %p240, %s18, 1
      %s242 = smul.addr %s241, 8
      %s243 = smul.addr %s242, 8
      %s244 = scalar_lea.vmem %s0, %s243
      %p245 = scmp.lt.s32.totalorder %s18, 1
      %s246 = scalar_select %p245, %s18, 1
      %s247 = smul.addr %s246, 8
      %s248 = smul.addr %s247, 8
      %s249 = scalar_lea.vmem %s5, %s248
      %p251 = scmp.eq.s32.totalorder %s18, 0
      // Predicated region
      $region41: #{bottleneck_forward.5} parent=39 // pred_check
        %p252 = pneg %p251
      $region42: #{bottleneck_forward.5} parent=39 // pred_check_branch
        %254 = sbr.rel (%p252) target = $region44
      $region43: #{bottleneck_forward.5} parent=39 // pred_region
        %vm255 = vcmask 254976
        %256 = vst.msk [vmem:[%s6] sm:$0x3] %vm255, 0.0
        %vm257 = vcmask 261120
        %258 = vst.msk [vmem:[#allocation2] sm:$0xff] %vm257, 0.0
        %259 = vst.msk [vmem:[#allocation2 + $0x8] sm:$0x3] %vm255, 0.0
        %260 = vst.msk [vmem:[#allocation2 + $0x10] sm:$0xff] %vm257, 0.0
        %261 = vst.msk [vmem:[#allocation2 + $0x18] sm:$0x3] %vm255, 0.0
        %262 = vst.msk [vmem:[#allocation2 + $0x20] sm:$0xff] %vm257, 0.0
        %263 = vst.msk [vmem:[#allocation2 + $0x28] sm:$0x3] %vm255, 0.0
        %264 = vst.msk [vmem:[#allocation2 + $0x30] sm:$0xff] %vm257, 0.0
        %265 = vst.msk [vmem:[#allocation2 + $0x38] sm:$0x3] %vm255, 0.0
        %266 = vst.msk [vmem:[#allocation2 + $0x40] sm:$0xff] %vm257, 0.0
        %267 = vst.msk [vmem:[#allocation2 + $0x48] sm:$0x3] %vm255, 0.0
        %268 = vst.msk [vmem:[#allocation2 + $0x50] sm:$0xff] %vm257, 0.0
        %269 = vst.msk [vmem:[#allocation2 + $0x58] sm:$0x3] %vm255, 0.0
        %270 = vst.msk [vmem:[#allocation2 + $0x60] sm:$0xff] %vm257, 0.0
        %271 = vst.msk [vmem:[#allocation2 + $0x68] sm:$0x3] %vm255, 0.0
        %272 = vst.msk [vmem:[#allocation2 + $0x70] sm:$0xff] %vm257, 0.0
        %273 = vst.msk [vmem:[#allocation2 + $0x78] sm:$0x3] %vm255, 0.0
        %274 = vst.msk [vmem:[#allocation2 + $0x80] sm:$0xff] %vm257, 0.0
        %275 = vst.msk [vmem:[#allocation2 + $0x88] sm:$0x3] %vm255, 0.0
        %276 = vst.msk [vmem:[#allocation2 + $0x90] sm:$0xff] %vm257, 0.0
        %277 = vst.msk [vmem:[#allocation2 + $0x98] sm:$0x3] %vm255, 0.0
      $region44: #{bottleneck_forward.5} parent=39 // pred_fallthru
        _
      %v278 = vld [vmem:[%s1] sm:$0x3]
      %v279 = vld [vmem:[%s2] sm:$0x1]
      %v280 = vld [vmem:[%s3] sm:$0x1]
      %v281 = vmul.f32 %v278, 0.0078125
      %v282 = vmul.f32 %v281, %v281
      %v284 = vrot.slane %v282, 7
      %v286 = vsub.f32 %v281, %v284
      %v287 = vadd.f32 %v286, 1e-05
      %v288 = vrsqrt.pop %v287
      %v291 = vunpack.c.l.s4 1966171168
      %v292 = vunpack.c.0.s8 %v291
      %v293 = vlaneseq
      %v294 = vshrl.u32 %v293, 7
      %v295 = vsub.s32 %v292, %v294
      %v296 = vrot.slane %v288, %v295
      %v297 = vcombine.high %v296, %v296
      %v299 = vunpack.c.l.s4 1966171168
      %v300 = vunpack.c.0.s8 %v299
      %v301 = vlaneseq
      %v302 = vshrl.u32 %v301, 7
      %v303 = vsub.s32 %v300, %v302
      %v304 = vrot.slane %v297, %v303
      %v306 = vmul.f32 %v279, %v304
      %v307 = vmul.f32 %v281, %v306
      %v308 = vsub.f32 %v280, %v307
      %v309 = vld [vmem:[%s244] sm:$0xff]
      %v310 = vld [vmem:[%s244 + $0x8] sm:$0xff]
      %v311 = vld [vmem:[%s244 + $0x10] sm:$0xff]
      %v312 = vld [vmem:[%s244 + $0x18] sm:$0xff]
      %v313 = vld [vmem:[%s244 + $0x20] sm:$0xff]
      %v314 = vld [vmem:[%s244 + $0x28] sm:$0xff]
      %v315 = vld [vmem:[%s244 + $0x30] sm:$0xff]
      %v316 = vld [vmem:[%s244 + $0x38] sm:$0xff]
      %v318 = vlaneseq
      %v319 = vshrl.u32 %v318, 7
      %v320 = vsub.s32 0, %v319
      %v321 = vrot.slane %v306, %v320
      %v323 = vmul.f32 %v309, %v321
      %v324 = vmul.f32 %v310, %v321
      %v325 = vmul.f32 %v311, %v321
      %v326 = vmul.f32 %v312, %v321
      %v327 = vmul.f32 %v313, %v321
      %v328 = vmul.f32 %v314, %v321
      %v329 = vmul.f32 %v315, %v321
      %v330 = vmul.f32 %v316, %v321
      %v332 = vlaneseq
      %v333 = vshrl.u32 %v332, 7
      %v334 = vsub.s32 0, %v333
      %v335 = vrot.slane %v308, %v334
      %v337 = vadd.f32 %v323, %v335
      %v338 = vadd.f32 %v324, %v335
      %v339 = vadd.f32 %v325, %v335
      %v340 = vadd.f32 %v326, %v335
      %v341 = vadd.f32 %v327, %v335
      %v342 = vadd.f32 %v328, %v335
      %v343 = vadd.f32 %v329, %v335
      %v344 = vadd.f32 %v330, %v335
      %v345 = vmax.f32 %v337, 0.0
      %v346 = vmax.f32 %v338, 0.0
      %v347 = vmax.f32 %v339, 0.0
      %v348 = vmax.f32 %v340, 0.0
      %v349 = vmax.f32 %v341, 0.0
      %v350 = vmax.f32 %v342, 0.0
      %v351 = vmax.f32 %v343, 0.0
      %v352 = vmax.f32 %v344, 0.0
      %s353 = scalar_lea.vmem [#allocation2], 16
      %vm354 = vcmask 261120
      %355 = vst.msk [vmem:[%s353 + $0x1] sm:$0xff] %vm354, %v345
      %356 = vst.msk [vmem:[%s353 + $0x11] sm:$0xff] %vm354, %v346
      %357 = vst.msk [vmem:[%s353 + $0x21] sm:$0xff] %vm354, %v347
      %358 = vst.msk [vmem:[%s353 + $0x31] sm:$0xff] %vm354, %v348
      %359 = vst.msk [vmem:[%s353 + $0x41] sm:$0xff] %vm354, %v349
      %360 = vst.msk [vmem:[%s353 + $0x51] sm:$0xff] %vm354, %v350
      %361 = vst.msk [vmem:[%s353 + $0x61] sm:$0xff] %vm354, %v351
      %362 = vst.msk [vmem:[%s353 + $0x71] sm:$0xff] %vm354, %v352
      %v363 = vld [vmem:[#allocation2] sm:$0xff]
      %v364 = vld [vmem:[#allocation2 + $0x10] sm:$0xff]
      %v365 = vld [vmem:[#allocation2 + $0x20] sm:$0xff]
      %v366 = vld [vmem:[#allocation2 + $0x30] sm:$0xff]
      %v367 = vld [vmem:[#allocation2 + $0x40] sm:$0xff]
      %v368 = vld [vmem:[#allocation2 + $0x50] sm:$0xff]
      %v369 = vld [vmem:[#allocation2 + $0x60] sm:$0xff]
      %v370 = vld [vmem:[#allocation2 + $0x70] sm:$0xff]
      %v371 = vld [vmem:[#allocation2 + $0x1] sm:$0xff]
      %v372 = vld [vmem:[#allocation2 + $0x11] sm:$0xff]
      %v373 = vld [vmem:[#allocation2 + $0x21] sm:$0xff]
      %v374 = vld [vmem:[#allocation2 + $0x31] sm:$0xff]
      %v375 = vld [vmem:[#allocation2 + $0x41] sm:$0xff]
      %v376 = vld [vmem:[#allocation2 + $0x51] sm:$0xff]
      %v377 = vld [vmem:[#allocation2 + $0x61] sm:$0xff]
      %v378 = vld [vmem:[#allocation2 + $0x71] sm:$0xff]
      %v379 = vld [vmem:[#allocation2 + $0x2] sm:$0xff]
      %v380 = vld [vmem:[#allocation2 + $0x12] sm:$0xff]
      %v381 = vld [vmem:[#allocation2 + $0x22] sm:$0xff]
      %v382 = vld [vmem:[#allocation2 + $0x32] sm:$0xff]
      %v383 = vld [vmem:[#allocation2 + $0x42] sm:$0xff]
      %v384 = vld [vmem:[#allocation2 + $0x52] sm:$0xff]
      %v385 = vld [vmem:[#allocation2 + $0x62] sm:$0xff]
      %v386 = vld [vmem:[#allocation2 + $0x72] sm:$0xff]
      %v387 = vld [vmem:[%s353] sm:$0xff]
      %v388 = vld [vmem:[%s353 + $0x10] sm:$0xff]
      %v389 = vld [vmem:[%s353 + $0x20] sm:$0xff]
      %v390 = vld [vmem:[%s353 + $0x30] sm:$0xff]
      %v391 = vld [vmem:[%s353 + $0x40] sm:$0xff]
      %v392 = vld [vmem:[%s353 + $0x50] sm:$0xff]
      %v393 = vld [vmem:[%s353 + $0x60] sm:$0xff]
      %v394 = vld [vmem:[%s353 + $0x70] sm:$0xff]
      %v395 = vld [vmem:[%s353 + $0x1] sm:$0xff]
      %v396 = vld [vmem:[%s353 + $0x11] sm:$0xff]
      %v397 = vld [vmem:[%s353 + $0x21] sm:$0xff]
      %v398 = vld [vmem:[%s353 + $0x31] sm:$0xff]
      %v399 = vld [vmem:[%s353 + $0x41] sm:$0xff]
      %v400 = vld [vmem:[%s353 + $0x51] sm:$0xff]
      %v401 = vld [vmem:[%s353 + $0x61] sm:$0xff]
      %v402 = vld [vmem:[%s353 + $0x71] sm:$0xff]
      %v403 = vld [vmem:[%s353 + $0x2] sm:$0xff]
      %v404 = vld [vmem:[%s353 + $0x12] sm:$0xff]
      %v405 = vld [vmem:[%s353 + $0x22] sm:$0xff]
      %v406 = vld [vmem:[%s353 + $0x32] sm:$0xff]
      %v407 = vld [vmem:[%s353 + $0x42] sm:$0xff]
      %v408 = vld [vmem:[%s353 + $0x52] sm:$0xff]
      %v409 = vld [vmem:[%s353 + $0x62] sm:$0xff]
      %v410 = vld [vmem:[%s353 + $0x72] sm:$0xff]
      %s411 = scalar_lea.vmem [#allocation2], 32
      %v412 = vld [vmem:[%s411] sm:$0xff]
      %v413 = vld [vmem:[%s411 + $0x10] sm:$0xff]
      %v414 = vld [vmem:[%s411 + $0x20] sm:$0xff]
      %v415 = vld [vmem:[%s411 + $0x30] sm:$0xff]
      %v416 = vld [vmem:[%s411 + $0x40] sm:$0xff]
      %v417 = vld [vmem:[%s411 + $0x50] sm:$0xff]
      %v418 = vld [vmem:[%s411 + $0x60] sm:$0xff]
      %v419 = vld [vmem:[%s411 + $0x70] sm:$0xff]
      %v420 = vld [vmem:[%s411 + $0x1] sm:$0xff]
      %v421 = vld [vmem:[%s411 + $0x11] sm:$0xff]
      %v422 = vld [vmem:[%s411 + $0x21] sm:$0xff]
      %v423 = vld [vmem:[%s411 + $0x31] sm:$0xff]
      %v424 = vld [vmem:[%s411 + $0x41] sm:$0xff]
      %v425 = vld [vmem:[%s411 + $0x51] sm:$0xff]
      %v426 = vld [vmem:[%s411 + $0x61] sm:$0xff]
      %v427 = vld [vmem:[%s411 + $0x71] sm:$0xff]
      %v428 = vld [vmem:[%s411 + $0x2] sm:$0xff]
      %v429 = vld [vmem:[%s411 + $0x12] sm:$0xff]
      %v430 = vld [vmem:[%s411 + $0x22] sm:$0xff]
      %v431 = vld [vmem:[%s411 + $0x32] sm:$0xff]
      %v432 = vld [vmem:[%s411 + $0x42] sm:$0xff]
      %v433 = vld [vmem:[%s411 + $0x52] sm:$0xff]
      %v434 = vld [vmem:[%s411 + $0x62] sm:$0xff]
      %v435 = vld [vmem:[%s411 + $0x72] sm:$0xff]
      %444 = vrot.lane.b32.xlu0 %v371, 32
      %v445 = vpop.permute.xlu0 %444
      %446 = vrot.lane.b32.xlu0 %v372, 32
      %v447 = vpop.permute.xlu0 %446
      %448 = vrot.lane.b32.xlu0 %v373, 32
      %v449 = vpop.permute.xlu0 %448
      %450 = vrot.lane.b32.xlu0 %v374, 32
      %v451 = vpop.permute.xlu0 %450
      %452 = vrot.lane.b32.xlu0 %v375, 32
      %v453 = vpop.permute.xlu0 %452
      %454 = vrot.lane.b32.xlu0 %v376, 32
      %v455 = vpop.permute.xlu0 %454
      %456 = vrot.lane.b32.xlu0 %v377, 32
      %v457 = vpop.permute.xlu0 %456
      %458 = vrot.lane.b32.xlu0 %v378, 32
      %v459 = vpop.permute.xlu0 %458
      %476 = vrot.lane.b32.xlu0 %v379, 64
      %v477 = vpop.permute.xlu0 %476
      %478 = vrot.lane.b32.xlu0 %v380, 64
      %v479 = vpop.permute.xlu0 %478
      %480 = vrot.lane.b32.xlu0 %v381, 64
      %v481 = vpop.permute.xlu0 %480
      %482 = vrot.lane.b32.xlu0 %v382, 64
      %v483 = vpop.permute.xlu0 %482
      %484 = vrot.lane.b32.xlu0 %v383, 64
      %v485 = vpop.permute.xlu0 %484
      %486 = vrot.lane.b32.xlu0 %v384, 64
      %v487 = vpop.permute.xlu0 %486
      %488 = vrot.lane.b32.xlu0 %v385, 64
      %v489 = vpop.permute.xlu0 %488
      %490 = vrot.lane.b32.xlu0 %v386, 64
      %v491 = vpop.permute.xlu0 %490
      %508 = vrot.lane.b32.xlu0 %v387, 96
      %v509 = vpop.permute.xlu0 %508
      %510 = vrot.lane.b32.xlu0 %v388, 96
      %v511 = vpop.permute.xlu0 %510
      %512 = vrot.lane.b32.xlu0 %v389, 96
      %v513 = vpop.permute.xlu0 %512
      %514 = vrot.lane.b32.xlu0 %v390, 96
      %v515 = vpop.permute.xlu0 %514
      %516 = vrot.lane.b32.xlu0 %v391, 96
      %v517 = vpop.permute.xlu0 %516
      %518 = vrot.lane.b32.xlu0 %v392, 96
      %v519 = vpop.permute.xlu0 %518
      %520 = vrot.lane.b32.xlu0 %v393, 96
      %v521 = vpop.permute.xlu0 %520
      %522 = vrot.lane.b32.xlu0 %v394, 96
      %v523 = vpop.permute.xlu0 %522
      %540 = vrot.lane.b32.xlu0 %v403, 32
      %v541 = vpop.permute.xlu0 %540
      %542 = vrot.lane.b32.xlu0 %v404, 32
      %v543 = vpop.permute.xlu0 %542
      %544 = vrot.lane.b32.xlu0 %v405, 32
      %v545 = vpop.permute.xlu0 %544
      %546 = vrot.lane.b32.xlu0 %v406, 32
      %v547 = vpop.permute.xlu0 %546
      %548 = vrot.lane.b32.xlu0 %v407, 32
      %v549 = vpop.permute.xlu0 %548
      %550 = vrot.lane.b32.xlu0 %v408, 32
      %v551 = vpop.permute.xlu0 %550
      %552 = vrot.lane.b32.xlu0 %v409, 32
      %v553 = vpop.permute.xlu0 %552
      %554 = vrot.lane.b32.xlu0 %v410, 32
      %v555 = vpop.permute.xlu0 %554
      %572 = vrot.lane.b32.xlu0 %v412, 64
      %v573 = vpop.permute.xlu0 %572
      %574 = vrot.lane.b32.xlu0 %v413, 64
      %v575 = vpop.permute.xlu0 %574
      %576 = vrot.lane.b32.xlu0 %v414, 64
      %v577 = vpop.permute.xlu0 %576
      %578 = vrot.lane.b32.xlu0 %v415, 64
      %v579 = vpop.permute.xlu0 %578
      %580 = vrot.lane.b32.xlu0 %v416, 64
      %v581 = vpop.permute.xlu0 %580
      %582 = vrot.lane.b32.xlu0 %v417, 64
      %v583 = vpop.permute.xlu0 %582
      %584 = vrot.lane.b32.xlu0 %v418, 64
      %v585 = vpop.permute.xlu0 %584
      %586 = vrot.lane.b32.xlu0 %v419, 64
      %v587 = vpop.permute.xlu0 %586
      %604 = vrot.lane.b32.xlu0 %v420, 96
      %v605 = vpop.permute.xlu0 %604
      %606 = vrot.lane.b32.xlu0 %v421, 96
      %v607 = vpop.permute.xlu0 %606
      %608 = vrot.lane.b32.xlu0 %v422, 96
      %v609 = vpop.permute.xlu0 %608
      %610 = vrot.lane.b32.xlu0 %v423, 96
      %v611 = vpop.permute.xlu0 %610
      %612 = vrot.lane.b32.xlu0 %v424, 96
      %v613 = vpop.permute.xlu0 %612
      %614 = vrot.lane.b32.xlu0 %v425, 96
      %v615 = vpop.permute.xlu0 %614
      %616 = vrot.lane.b32.xlu0 %v426, 96
      %v617 = vpop.permute.xlu0 %616
      %618 = vrot.lane.b32.xlu0 %v427, 96
      %v619 = vpop.permute.xlu0 %618
      %v628 = vsel %vm354, %v363, %v445
      %v629 = vsel %vm354, %v364, %v447
      %v630 = vsel %vm354, %v365, %v449
      %v631 = vsel %vm354, %v366, %v451
      %v632 = vsel %vm354, %v367, %v453
      %v633 = vsel %vm354, %v368, %v455
      %v634 = vsel %vm354, %v369, %v457
      %v635 = vsel %vm354, %v370, %v459
      %vm636 = vcmask 523264
      %v637 = vsel %vm636, %v628, %v477
      %v638 = vsel %vm636, %v629, %v479
      %v639 = vsel %vm636, %v630, %v481
      %v640 = vsel %vm636, %v631, %v483
      %v641 = vsel %vm636, %v632, %v485
      %v642 = vsel %vm636, %v633, %v487
      %v643 = vsel %vm636, %v634, %v489
      %v644 = vsel %vm636, %v635, %v491
      %vm645 = vcmask 785408
      %v646 = vsel %vm645, %v637, %v509
      %v647 = vsel %vm645, %v638, %v511
      %v648 = vsel %vm645, %v639, %v513
      %v649 = vsel %vm645, %v640, %v515
      %v650 = vsel %vm645, %v641, %v517
      %v651 = vsel %vm645, %v642, %v519
      %v652 = vsel %vm645, %v643, %v521
      %v653 = vsel %vm645, %v644, %v523
      %v654 = vsel %vm354, %v395, %v541
      %v655 = vsel %vm354, %v396, %v543
      %v656 = vsel %vm354, %v397, %v545
      %v657 = vsel %vm354, %v398, %v547
      %v658 = vsel %vm354, %v399, %v549
      %v659 = vsel %vm354, %v400, %v551
      %v660 = vsel %vm354, %v401, %v553
      %v661 = vsel %vm354, %v402, %v555
      %v662 = vsel %vm636, %v654, %v573
      %v663 = vsel %vm636, %v655, %v575
      %v664 = vsel %vm636, %v656, %v577
      %v665 = vsel %vm636, %v657, %v579
      %v666 = vsel %vm636, %v658, %v581
      %v667 = vsel %vm636, %v659, %v583
      %v668 = vsel %vm636, %v660, %v585
      %v669 = vsel %vm636, %v661, %v587
      %v670 = vsel %vm645, %v662, %v605
      %v671 = vsel %vm645, %v663, %v607
      %v672 = vsel %vm645, %v664, %v609
      %v673 = vsel %vm645, %v665, %v611
      %v674 = vsel %vm645, %v666, %v613
      %v675 = vsel %vm645, %v667, %v615
      %v676 = vsel %vm645, %v668, %v617
      %v677 = vsel %vm645, %v669, %v619
      %v678 = vpack.c.bf16 %v647, %v646
      %v679 = vpack.c.bf16 %v671, %v670
      %v680 = vpack.c.bf16 %v429, %v428
      %v681 = vpack.c.bf16 %v649, %v648
      %v682 = vpack.c.bf16 %v673, %v672
      %v683 = vpack.c.bf16 %v431, %v430
      %v684 = vpack.c.bf16 %v651, %v650
      %v685 = vpack.c.bf16 %v675, %v674
      %v686 = vpack.c.bf16 %v433, %v432
      %v687 = vpack.c.bf16 %v653, %v652
      %v688 = vpack.c.bf16 %v677, %v676
      %v689 = vpack.c.bf16 %v435, %v434
      %v690 = vld [vmem:[%s4] sm:$0xf]
      %v691 = vld [vmem:[%s4 + $0x4] sm:$0xf]
      %v692 = vld [vmem:[%s4 + $0x8] sm:$0xf]
      %v693 = vld [vmem:[%s4 + $0xc] sm:$0xf]
      %v694 = vld [vmem:[%s4 + $0x10] sm:$0xf]
      %v695 = vld [vmem:[%s4 + $0x14] sm:$0xf]
      %v696 = vld [vmem:[%s4 + $0x18] sm:$0xf]
      %v697 = vld [vmem:[%s4 + $0x1c] sm:$0xf]
      %v698 = vld [vmem:[%s4 + $0x20] sm:$0xf]
      %v699 = vld [vmem:[%s4 + $0x24] sm:$0xf]
      %v700 = vld [vmem:[%s4 + $0x28] sm:$0xf]
      %v701 = vld [vmem:[%s4 + $0x2c] sm:$0xf]
      %v702 = vld [vmem:[%s4 + $0x30] sm:$0xf]
      %v703 = vld [vmem:[%s4 + $0x34] sm:$0xf]
      %v704 = vld [vmem:[%s4 + $0x38] sm:$0xf]
      %v705 = vld [vmem:[%s4 + $0x3c] sm:$0xf]
      %v706 = vld [vmem:[%s4 + $0x40] sm:$0xf]
      %v707 = vld [vmem:[%s4 + $0x44] sm:$0xf]
      %v708 = vld [vmem:[%s4 + $0x48] sm:$0xf]
      %v709 = vld [vmem:[%s4 + $0x4c] sm:$0xf]
      %v710 = vld [vmem:[%s4 + $0x50] sm:$0xf]
      %v711 = vld [vmem:[%s4 + $0x54] sm:$0xf]
      %v712 = vld [vmem:[%s4 + $0x58] sm:$0xf]
      %v713 = vld [vmem:[%s4 + $0x5c] sm:$0xf]
      %v714 = vld [vmem:[%s4 + $0x60] sm:$0xf]
      %v715 = vld [vmem:[%s4 + $0x64] sm:$0xf]
      %v716 = vld [vmem:[%s4 + $0x68] sm:$0xf]
      %v717 = vld [vmem:[%s4 + $0x6c] sm:$0xf]
      %v718 = vld [vmem:[%s4 + $0x70] sm:$0xf]
      %v719 = vld [vmem:[%s4 + $0x74] sm:$0xf]
      %v720 = vld [vmem:[%s4 + $0x78] sm:$0xf]
      %v721 = vld [vmem:[%s4 + $0x7c] sm:$0xf]
      %v722 = vld [vmem:[%s4 + $0x80] sm:$0xf]
      %v723 = vld [vmem:[%s4 + $0x84] sm:$0xf]
      %v724 = vld [vmem:[%s4 + $0x88] sm:$0xf]
      %v725 = vld [vmem:[%s4 + $0x8c] sm:$0xf]
      %v762 = vunpack.c.l.b16 %v690
      %v763 = vunpack.c.l.b16 %v691
      %v764 = vunpack.c.l.b16 %v692
      %v765 = vunpack.c.l.b16 %v693
      %v766 = vunpack.c.l.b16 %v694
      %v767 = vunpack.c.l.b16 %v695
      %v768 = vunpack.c.l.b16 %v696
      %v769 = vunpack.c.l.b16 %v697
      %v770 = vunpack.c.l.b16 %v698
      %v771 = vunpack.c.l.b16 %v699
      %v772 = vunpack.c.l.b16 %v700
      %v773 = vunpack.c.l.b16 %v701
      %v774 = vunpack.c.l.b16 %v702
      %v775 = vunpack.c.l.b16 %v703
      %v776 = vunpack.c.l.b16 %v704
      %v777 = vunpack.c.l.b16 %v705
      %v778 = vunpack.c.l.b16 %v706
      %v779 = vunpack.c.l.b16 %v707
      %v780 = vunpack.c.l.b16 %v708
      %v781 = vunpack.c.l.b16 %v709
      %v782 = vunpack.c.l.b16 %v710
      %v783 = vunpack.c.l.b16 %v711
      %v784 = vunpack.c.l.b16 %v712
      %v785 = vunpack.c.l.b16 %v713
      %v786 = vunpack.c.l.b16 %v714
      %v787 = vunpack.c.l.b16 %v715
      %v788 = vunpack.c.l.b16 %v716
      %v789 = vunpack.c.l.b16 %v717
      %v790 = vunpack.c.l.b16 %v718
      %v791 = vunpack.c.l.b16 %v719
      %v792 = vunpack.c.l.b16 %v720
      %v793 = vunpack.c.l.b16 %v721
      %v794 = vunpack.c.l.b16 %v722
      %v795 = vunpack.c.l.b16 %v723
      %v796 = vunpack.c.l.b16 %v724
      %v797 = vunpack.c.l.b16 %v725
      %v798 = vpack.c.b16 %v763, %v762
      %v799 = vpack.c.b16 %v765, %v764
      %v800 = vpack.c.b16 %v767, %v766
      %v801 = vpack.c.b16 %v769, %v768
      %v802 = vpack.c.b16 %v771, %v770
      %v803 = vpack.c.b16 %v773, %v772
      %v804 = vpack.c.b16 %v775, %v774
      %v805 = vpack.c.b16 %v777, %v776
      %v806 = vpack.c.b16 %v779, %v778
      %v807 = vpack.c.b16 %v781, %v780
      %v808 = vpack.c.b16 %v783, %v782
      %v809 = vpack.c.b16 %v785, %v784
      %v810 = vpack.c.b16 %v787, %v786
      %v811 = vpack.c.b16 %v789, %v788
      %v812 = vpack.c.b16 %v791, %v790
      %v813 = vpack.c.b16 %v793, %v792
      %v814 = vpack.c.b16 %v795, %v794
      %v815 = vpack.c.b16 %v797, %v796
      %v835 = vsel %vm354, %v680, 0
      %v838 = vsel %vm354, %v683, 0
      %v841 = vsel %vm354, %v686, 0
      %v844 = vsel %vm354, %v689, 0
      %846 = vmatprep.subr.bf16.mxu0 0
      %847 = vmatpush1.bf16.msra.mxu0 %v805
      %848 = vmatprep.subr.bf16.mxu0 0
      %849 = vmatpush1.bf16.msra.mxu0 %v804
      %850 = vmatprep.subr.bf16.mxu0 0
      %851 = vmatpush1.bf16.msra.mxu0 %v803
      %852 = vmatprep.subr.bf16.mxu0 0
      %853 = vmatpush1.bf16.msra.mxu0 %v802
      %854 = vmatprep.subr.bf16.mxu0 0
      %855 = vmatpush1.bf16.msra.mxu0 %v801
      %856 = vmatprep.subr.bf16.mxu0 0
      %857 = vmatpush1.bf16.msra.mxu0 %v800
      %858 = vmatprep.subr.bf16.mxu0 0
      %859 = vmatpush1.bf16.msra.mxu0 %v799
      %860 = vmatprep.subr.bf16.mxu0 0
      %861 = vmatpush1.bf16.msra.mxu0 %v798
      %862 = vmatprep.subr.bf16.mxu0 0
      %863 = vmatpush2.bf16.msra.mxu0 %v813
      %864 = vmatprep.subr.bf16.mxu0 0
      %865 = vmatpush2.bf16.msra.mxu0 %v812
      %866 = vmatprep.subr.bf16.mxu0 0
      %867 = vmatpush2.bf16.msra.mxu0 %v811
      %868 = vmatprep.subr.bf16.mxu0 0
      %869 = vmatpush2.bf16.msra.mxu0 %v810
      %870 = vmatprep.subr.bf16.mxu0 0
      %871 = vmatpush2.bf16.msra.mxu0 %v809
      %872 = vmatprep.subr.bf16.mxu0 0
      %873 = vmatpush2.bf16.msra.mxu0 %v808
      %874 = vmatprep.subr.bf16.mxu0 0
      %875 = vmatpush2.bf16.msra.mxu0 %v807
      %876 = vmatprep.subr.bf16.mxu0 0
      %877 = vmatpush2.bf16.msra.mxu0 %v806
      %878 = vmatprep.mubr.bf16.mxu0 %v679
      %879 = vmatmul.mubr.bf16.gmra.mxu0 %v678
      %v880 = vpop.f32.mrf.mxu0
      %v881 = vadd.f32 0.0, %v880
      %v882 = vpop.f32.mrf.mxu0
      %v883 = vpop.f32.mrf.mxu0
      %v884 = vadd.f32 0.0, %v883
      %v885 = vpop.f32.mrf.mxu0
      %886 = vmatprep.mubr.bf16.mxu0 %v682
      %887 = vmatmul.mubr.bf16.gmra.mxu0 %v681
      %v888 = vpop.f32.mrf.mxu0
      %v889 = vadd.f32 0.0, %v888
      %v890 = vpop.f32.mrf.mxu0
      %v891 = vpop.f32.mrf.mxu0
      %v892 = vadd.f32 0.0, %v891
      %v893 = vpop.f32.mrf.mxu0
      %894 = vmatprep.mubr.bf16.mxu0 %v685
      %895 = vmatmul.mubr.bf16.gmra.mxu0 %v684
      %v896 = vpop.f32.mrf.mxu0
      %v897 = vadd.f32 0.0, %v896
      %v898 = vpop.f32.mrf.mxu0
      %v899 = vpop.f32.mrf.mxu0
      %v900 = vadd.f32 0.0, %v899
      %v901 = vpop.f32.mrf.mxu0
      %902 = vmatprep.mubr.bf16.mxu0 %v688
      %903 = vmatmul.mubr.bf16.gmra.mxu0 %v687
      %v904 = vpop.f32.mrf.mxu0
      %v905 = vadd.f32 0.0, %v904
      %v906 = vpop.f32.mrf.mxu0
      %v907 = vpop.f32.mrf.mxu0
      %v908 = vadd.f32 0.0, %v907
      %v909 = vpop.f32.mrf.mxu0
      %910 = vdwg.mxu0
      %911 = vmatprep.subr.bf16.mxu0 0
      %912 = vmatpush1.bf16.msra.mxu0 0
      %913 = vmatprep.subr.bf16.mxu0 0
      %914 = vmatpush1.bf16.msra.mxu0 0
      %915 = vmatprep.subr.bf16.mxu0 0
      %916 = vmatpush1.bf16.msra.mxu0 0
      %917 = vmatprep.subr.bf16.mxu0 0
      %918 = vmatpush1.bf16.msra.mxu0 0
      %919 = vmatprep.subr.bf16.mxu0 0
      %920 = vmatpush1.bf16.msra.mxu0 0
      %921 = vmatprep.subr.bf16.mxu0 0
      %922 = vmatpush1.bf16.msra.mxu0 0
      %923 = vmatprep.subr.bf16.mxu0 0
      %924 = vmatpush1.bf16.msra.mxu0 %v815
      %925 = vmatprep.subr.bf16.mxu0 0
      %926 = vmatpush1.bf16.msra.mxu0 %v814
      %927 = vmatprep.subr.bf16.mxu0 0
      %928 = vmatpush2.bf16.msra.mxu0 0
      %929 = vmatprep.subr.bf16.mxu0 0
      %930 = vmatpush2.bf16.msra.mxu0 0
      %931 = vmatprep.subr.bf16.mxu0 0
      %932 = vmatpush2.bf16.msra.mxu0 0
      %933 = vmatprep.subr.bf16.mxu0 0
      %934 = vmatpush2.bf16.msra.mxu0 0
      %935 = vmatprep.subr.bf16.mxu0 0
      %936 = vmatpush2.bf16.msra.mxu0 0
      %937 = vmatprep.subr.bf16.mxu0 0
      %938 = vmatpush2.bf16.msra.mxu0 0
      %939 = vmatprep.subr.bf16.mxu0 0
      %940 = vmatpush2.bf16.msra.mxu0 0
      %941 = vmatprep.subr.bf16.mxu0 0
      %942 = vmatpush2.bf16.msra.mxu0 0
      %943 = vmatprep.mubr.bf16.mxu0 0
      %944 = vmatmul.mubr.bf16.gmra.mxu0 %v835
      %v945 = vpop.f32.mrf.mxu0
      %v946 = vadd.f32 %v881, %v945
      %v947 = vpop.f32.mrf.mxu0
      %v948 = vpop.f32.mrf.mxu0
      %v949 = vadd.f32 %v884, %v948
      %v950 = vpop.f32.mrf.mxu0
      %951 = vmatprep.mubr.bf16.mxu0 0
      %952 = vmatmul.mubr.bf16.gmra.mxu0 %v838
      %v953 = vpop.f32.mrf.mxu0
      %v954 = vadd.f32 %v889, %v953
      %v955 = vpop.f32.mrf.mxu0
      %v956 = vpop.f32.mrf.mxu0
      %v957 = vadd.f32 %v892, %v956
      %v958 = vpop.f32.mrf.mxu0
      %959 = vmatprep.mubr.bf16.mxu0 0
      %960 = vmatmul.mubr.bf16.gmra.mxu0 %v841
      %v961 = vpop.f32.mrf.mxu0
      %v962 = vadd.f32 %v897, %v961
      %v963 = vpop.f32.mrf.mxu0
      %v964 = vpop.f32.mrf.mxu0
      %v965 = vadd.f32 %v900, %v964
      %v966 = vpop.f32.mrf.mxu0
      %967 = vmatprep.mubr.bf16.mxu0 0
      %968 = vmatmul.mubr.bf16.gmra.mxu0 %v844
      %v969 = vpop.f32.mrf.mxu0
      %v970 = vadd.f32 %v905, %v969
      %v971 = vpop.f32.mrf.mxu0
      %v972 = vpop.f32.mrf.mxu0
      %v973 = vadd.f32 %v908, %v972
      %v974 = vpop.f32.mrf.mxu0
      %975 = vdwg.mxu0
      %976 = vst.msk [vmem:[%s249] sm:$0xff] %vm354, %v946
      %977 = vst.msk [vmem:[%s249 + $0x8] sm:$0xff] %vm354, %v949
      %978 = vst.msk [vmem:[%s249 + $0x10] sm:$0xff] %vm354, %v954
      %979 = vst.msk [vmem:[%s249 + $0x18] sm:$0xff] %vm354, %v957
      %980 = vst.msk [vmem:[%s249 + $0x20] sm:$0xff] %vm354, %v962
      %981 = vst.msk [vmem:[%s249 + $0x28] sm:$0xff] %vm354, %v965
      %982 = vst.msk [vmem:[%s249 + $0x30] sm:$0xff] %vm354, %v970
      %983 = vst.msk [vmem:[%s249 + $0x38] sm:$0xff] %vm354, %v973
      %v984 = vld [vmem:[%s6] sm:$0x3]
      %v985 = vsel %vm354, %v946, 0.0
      %v986 = vsel %vm354, %v949, 0.0
      %v987 = vadd.f32 %v985, %v986
      %v988 = vsel %vm354, %v954, 0.0
      %v989 = vadd.f32 %v987, %v988
      %v990 = vsel %vm354, %v957, 0.0
      %v991 = vadd.f32 %v989, %v990
      %v992 = vsel %vm354, %v962, 0.0
      %v993 = vadd.f32 %v991, %v992
      %v994 = vsel %vm354, %v965, 0.0
      %v995 = vadd.f32 %v993, %v994
      %v996 = vsel %vm354, %v970, 0.0
      %v997 = vadd.f32 %v995, %v996
      %v998 = vsel %vm354, %v973, 0.0
      %v999 = vadd.f32 %v997, %v998
      %v1000 = vrot.slane %v999, 4
      %v1001 = vadd.f32 %v999, %v1000
      %v1002 = vrot.slane %v1001, 2
      %v1003 = vadd.f32 %v1001, %v1002
      %v1004 = vrot.slane %v1003, 1
      %v1005 = vadd.f32 %v1003, %v1004
      %v1006 = vmul.f32 %v946, %v946
      %v1007 = vmul.f32 %v949, %v949
      %v1008 = vmul.f32 %v954, %v954
      %v1009 = vmul.f32 %v957, %v957
      %v1010 = vmul.f32 %v962, %v962
      %v1011 = vmul.f32 %v965, %v965
      %v1012 = vmul.f32 %v970, %v970
      %v1013 = vmul.f32 %v973, %v973
      %v1014 = vsel %vm354, %v1006, 0.0
      %v1015 = vsel %vm354, %v1007, 0.0
      %v1016 = vadd.f32 %v1014, %v1015
      %v1017 = vsel %vm354, %v1008, 0.0
      %v1018 = vadd.f32 %v1016, %v1017
      %v1019 = vsel %vm354, %v1009, 0.0
      %v1020 = vadd.f32 %v1018, %v1019
      %v1021 = vsel %vm354, %v1010, 0.0
      %v1022 = vadd.f32 %v1020, %v1021
      %v1023 = vsel %vm354, %v1011, 0.0
      %v1024 = vadd.f32 %v1022, %v1023
      %v1025 = vsel %vm354, %v1012, 0.0
      %v1026 = vadd.f32 %v1024, %v1025
      %v1027 = vsel %vm354, %v1013, 0.0
      %v1028 = vadd.f32 %v1026, %v1027
      %v1029 = vrot.slane %v1028, 4
      %v1030 = vadd.f32 %v1028, %v1029
      %v1031 = vrot.slane %v1030, 2
      %v1032 = vadd.f32 %v1030, %v1031
      %v1033 = vrot.slane %v1032, 1
      %v1034 = vadd.f32 %v1032, %v1033
      %vm1035 = vcmask 1040384
      %v1036 = vsel %vm1035, %v1005, %v1034
      %v1037 = vadd.f32 %v984, %v1036
      %vm1038 = vcmask 254976
      %1039 = vst.msk [vmem:[%s6] sm:$0x3] %vm1038, %v1037
      %p1040 = scmp.lt.s32.totalorder %s18, 1
      %s1041 = scalar_select %p1040, %s18, 1
      %s1042 = smul.addr %s1041, 8
      %s1043 = smul.addr %s1042, 8
      %s1044 = scalar_lea.vmem %s5, %s1043
      // Predicated region
      $region45: #{bottleneck_forward.5} parent=39 // pred_check
        %p1045 = pneg %p146
      $region46: #{bottleneck_forward.5} parent=39 // pred_check_branch
        %1047 = sbr.rel (%p1045) target = $region48
      $region47: #{bottleneck_forward.5} parent=39 // pred_region
        _
      $region48: #{bottleneck_forward.5} parent=39 // pred_fallthru
        _
      // Predicated region
      $region49: #{bottleneck_forward.5} parent=39 // pred_check
        %p1048 = pneg %p167
      $region50: #{bottleneck_forward.5} parent=39 // pred_check_branch
        %1050 = sbr.rel (%p1048) target = $region52
      $region51: #{bottleneck_forward.5} parent=39 // pred_region
        _
      $region52: #{bottleneck_forward.5} parent=39 // pred_fallthru
        _
      // Predicated region
      $region53: #{bottleneck_forward.5} parent=39 // pred_check
        %p1051 = pneg %p167
      $region54: #{bottleneck_forward.5} parent=39 // pred_check_branch
        %1053 = sbr.rel (%p1051) target = $region56
      $region55: #{bottleneck_forward.5} parent=39 // pred_region
        _
      $region56: #{bottleneck_forward.5} parent=39 // pred_fallthru
        _
    $region40: #{bottleneck_forward.5} parent=5 // pred_fallthru
      _
    %p1054 = scmp.le.s32.totalorder 2, %s13
    // Predicated region
    $region57: #{bottleneck_forward.5} parent=5 // pred_check
      %p1055 = pneg %p1054
    $region58: #{bottleneck_forward.5} parent=5 // pred_check_branch
      %1057 = sbr.rel (%p1055) target = $region60
    $region59: #{bottleneck_forward.5} parent=5 // pred_region
      %s1058 = ssub.s32 %s13, 2
      // Predicated region
      $region61: #{bottleneck_forward.5} parent=59 // pred_check
        %p1059 = pneg %p152
      $region62: #{bottleneck_forward.5} parent=59 // pred_check_branch
        %1061 = sbr.rel (%p1059) target = $region64
      $region63: #{bottleneck_forward.5} parent=59 // pred_region
        %p1062 = scmp.lt.s32.totalorder %s19, 1
        %s1063 = scalar_select %p1062, %s19, 1
        %s1064 = smul.addr %s1063, 8
        %s1065 = smul.addr %s1064, 8
        %s1066 = scalar_lea.vmem %s5, %s1065
      $region64: #{bottleneck_forward.5} parent=59 // pred_fallthru
        _
    $region60: #{bottleneck_forward.5} parent=5 // pred_fallthru
      _
  $region6: #{bottleneck_forward.5} parent=0 // loop_footer
    %s17 = sadd.s32 1, %s13
  $region7: #{bottleneck_forward.5} parent=0 // loop_footer_branch
    %12 = sbr.rel target = $region3
  $region8: #{bottleneck_forward.5} parent=0 // loop_exit
    _

</llo_original>
